<compile_context>
chip_gen: v6e
topology: v6e:2x2x1
jax: 0.10.0
libtpu: 0.0.40
codegen_flags: <defaults>
</compile_context>

<pallas_src>
import functools
import math

import jax
import jax.numpy as jnp
from jax.experimental import pallas as pl
from jax.experimental.pallas import tpu as pltpu


def _round_up(x, m):
    return ((x + m - 1) // m) * m


def _vmem_limit_bytes():
    # Generation-aware scoped-VMEM limit: ~75% of physical per-core VMEM,
    # capped at 96 MiB (v5e/v6e: 128 MiB -> 96 MiB, v7x: 64 MiB -> 48 MiB).
    try:
        cap = pltpu.get_tpu_info().vmem_capacity_bytes
    except Exception:  # pragma: no cover - be robust if the query is absent
        cap = 64 * 1024 * 1024
    return int(min(96 * 1024 * 1024, cap * 3 // 4))


# -----------------------------------------------------------------------------
# Shared masking math (operates on a (A, n_delays, B) value, lane-dense in B).
# -----------------------------------------------------------------------------
def _topk_delay_mask(w3, n_delays, top_k):
    """Zero all but the top_k |w| along the middle (delay) axis per (A, B).

    Ties keep the lower delay index (matches jax.lax.top_k in the reference).
    Pairwise-antisymmetric ranking: one compare per unordered delay pair.
    """
    aw = jnp.abs(w3.astype(jnp.float32))
    shp = (w3.shape[0], w3.shape[2])
    ranks = [jnp.zeros(shp, jnp.int32) for _ in range(n_delays)]
    for d1 in range(n_delays):
        a1 = aw[:, d1, :]
        for d2 in range(d1 + 1, n_delays):
            beat = (a1 >= aw[:, d2, :]).astype(jnp.int32)  # lower index wins ties
            ranks[d2] = ranks[d2] + beat
            ranks[d1] = ranks[d1] + (1 - beat)
    rank3 = jnp.stack(ranks, axis=1)                       # (A, D, B)
    return jnp.where(rank3 < top_k, w3, jnp.zeros_like(w3))


# -----------------------------------------------------------------------------
# Pass 1 (tiled path): top-k delay masking, native-layout input, (K, N) output.
# -----------------------------------------------------------------------------
def _delay_mask_kernel(w_ref, o_ref, *, ti, n_delays, top_k):
    # w_ref: (tn, ti * n_delays) block of the native (N, K) weight.
    # o_ref: (ti * n_delays, tn) block of the masked (K, N) weight.
    tn = w_ref.shape[0]
    w_kn = w_ref[...].T                          # in-kernel transpose (XLU slot)
    # Note: the reshape is a no-op relayout when n_delays is a multiple of the
    # sublane width (e.g. 8); otherwise Mosaic inserts a relayout (still correct).
    w3 = w_kn.reshape(ti, n_delays, tn)          # delay on the tiny middle axis
    masked = _topk_delay_mask(w3, n_delays, top_k)
    # Single dense, lane-wide store (no per-delay sublane-strided partial stores).
    o_ref[...] = masked.reshape(ti * n_delays, tn).astype(o_ref.dtype)


def precompute_masked_weight(weight, *, n_delays, top_k, out_dtype=None,
                             ti_target=128, tn_target=256):
    """weight: (out_features, in_features), delay fastest-varying inside
    in_features.  Returns the masked weight already transposed to
    (in_features, out_features) (MXU-native RHS), cast to out_dtype."""
    N, K = weight.shape
    assert K % n_delays == 0
    n_input = K // n_delays
    out_dtype = weight.dtype if out_dtype is None else out_dtype

    # n_input tile: the input block's lane extent is ti * n_delays -> must be a
    # multiple of 128 or the full K.
    if K <= 2048:
        ti = n_input
    else:
        g = 128 // math.gcd(n_delays, 128)
        ti = (min(n_input, max(g, ti_target)) // g) * g
        if ti <= 0 or (ti * n_delays) % 128 != 0:
            ti = n_input                          # fall back to full-K blocks
    # N tile: lane extent of the output block -> multiple of 128 or full N.
    if N <= 128:
        tn = N
    else:
        tn = min(tn_target, (N // 128) * 128)

    kernel = functools.partial(_delay_mask_kernel, ti=ti, n_delays=n_delays,
                               top_k=top_k)
    return pl.pallas_call(
        kernel,
        out_shape=jax.ShapeDtypeStruct((K, N), out_dtype),
        grid_spec=pltpu.PrefetchScalarGridSpec(
            num_scalar_prefetch=0,
            grid=(pl.cdiv(n_input, ti), pl.cdiv(N, tn)),
            in_specs=[pl.BlockSpec((tn, ti * n_delays), lambda i, j: (j, i))],
            out_specs=pl.BlockSpec((ti * n_delays, tn), lambda i, j: (i, j)),
        ),
        compiler_params=pltpu.CompilerParams(
            dimension_semantics=("parallel", "parallel"),
            vmem_limit_bytes=_vmem_limit_bytes()),
    )(weight)


# -----------------------------------------------------------------------------
# Pass 2 (tiled path): K-accumulating MXU matmul  y = x @ wt,  wt is (K, N).
# -----------------------------------------------------------------------------
def _matmul_kernel(x_ref, w_ref, o_ref, acc_ref):
    @pl.when(pl.program_id(2) == 0)
    def _():
        acc_ref[...] = jnp.zeros_like(acc_ref)

    acc_ref[...] += jnp.dot(x_ref[...], w_ref[...],
                            preferred_element_type=jnp.float32)

    @pl.when(pl.program_id(2) == pl.num_programs(2) - 1)
    def _():
        o_ref[...] = acc_ref[...].astype(o_ref.dtype)


def _tiled_matmul(x, wt, *, tm, tn, tk, out_dtype):
    M, K = x.shape
    K2, N = wt.shape
    assert K == K2

    # M tile: sublane axis of x / out.  Full-M blocks are always legal.
    tm = M if M <= tm else tm                 # default tm is a multiple of 8
    # N tile: lane axis of wt / out.  Full-N or a multiple of 128.
    tn = N if N <= tn else tn                 # default tn is a multiple of 128
    # Keep >= 2 parallel tiles so both TensorCores of a v7x chip get work.
    if pl.cdiv(M, tm) * pl.cdiv(N, tn) < 2:
        if N >= 256:
            tn = max(128, _round_up((N + 1) // 2, 128))
        elif M >= 16:
            tm = max(8, _round_up((M + 1) // 2, 8))
    # K tile: must tile K exactly (garbage in the K padding would corrupt the
    # accumulation).  Prefer a 128-multiple divisor of K, else take K whole,
    # else (rare) pad K with zeros.
    kpad = 0
    if K <= tk:
        tk = K
    else:
        tk_fit, t = 0, (tk // 128) * 128
        while t >= 128:
            if K % t == 0:
                tk_fit = t
                break
            t -= 128
        if tk_fit:
            tk = tk_fit
        else:
            tk = (tk // 128) * 128
            kpad = _round_up(K, tk) - K
    if kpad:
        x = jnp.pad(x, ((0, 0), (0, kpad)))
        wt = jnp.pad(wt, ((0, kpad), (0, 0)))
        K = K + kpad

    # No M/N padding or output slicing: Pallas drops out-of-bounds stores on
    # edge blocks, and edge-block garbage reads only feed dropped positions.
    return pl.pallas_call(
        _matmul_kernel,
        out_shape=jax.ShapeDtypeStruct((M, N), out_dtype),
        grid_spec=pltpu.PrefetchScalarGridSpec(
            num_scalar_prefetch=0,
            grid=(pl.cdiv(M, tm), pl.cdiv(N, tn), K // tk),
            in_specs=[
                pl.BlockSpec((tm, tk), lambda i, j, k: (i, k)),
                pl.BlockSpec((tk, tn), lambda i, j, k: (k, j)),
            ],
            out_specs=pl.BlockSpec((tm, tn), lambda i, j, k: (i, j)),
            scratch_shapes=[pltpu.VMEM((tm, tn), jnp.float32)],
        ),
        compiler_params=pltpu.CompilerParams(
            dimension_semantics=("parallel", "parallel", "arbitrary"),
            vmem_limit_bytes=_vmem_limit_bytes()),
    )(x, wt)


# -----------------------------------------------------------------------------
# Fused path (small shapes): mask + matmul in a single kernel, all in VMEM.
# -----------------------------------------------------------------------------
def _fused_kernel(x_ref, w_ref, o_ref, *, n_input, n_delays, top_k,
                  compute_dtype):
    N = w_ref.shape[0]
    w3 = w_ref[...].T.reshape(n_input, n_delays, N)        # (n_input, D, N)
    wt = _topk_delay_mask(w3, n_delays, top_k).reshape(n_input * n_delays, N)
    x = x_ref[...]
    if compute_dtype is not None:
        x = x.astype(compute_dtype)
        wt = wt.astype(compute_dtype)
    o_ref[...] = jnp.dot(x, wt,
                         preferred_element_type=jnp.float32).astype(o_ref.dtype)


# -----------------------------------------------------------------------------
# Public wrapper: DelayMaskingLayer.forward for 2-D x.
# -----------------------------------------------------------------------------
def delay_masking_linear(x, weight, *, n_delays, top_k, compute_dtype=None,
                         masked_wt=None, tm=256, tn=512, tk=None,
                         use_fused=None):
    """y = x @ mask_topk_delays(weight).T

    x: (batch, in_features); weight: (out_features, in_features).
    compute_dtype=jnp.bfloat16 runs the matmul operands in bf16 (f32 accum).
    masked_wt: optionally pass a cached result of precompute_masked_weight
    (inference-time caching, mirroring the module's _masked_projection)."""
    M, K = x.shape
    N, K2 = weight.shape
    assert K == K2 and K % n_delays == 0
    n_input = K // n_delays
    out_dtype = x.dtype

    op_dtype = compute_dtype if compute_dtype is not None else x.dtype
    if tk is None:
        tk = 2048 if jnp.dtype(op_dtype).itemsize <= 2 else 1024

    if use_fused is None:
        # Fuse when the whole problem comfortably fits in VMEM: removes a
        # launch and the HBM round-trip of the masked weight.
        use_fused = 4 * (M * K + 6 * N * K + M * N) <= (8 << 20)

    if use_fused and masked_wt is None:
        kernel = functools.partial(
            _fused_kernel, n_input=n_input, n_delays=n_delays, top_k=top_k,
            compute_dtype=compute_dtype)
        return pl.pallas_call(
            kernel,
            out_shape=jax.ShapeDtypeStruct((M, N), out_dtype),
            in_specs=[pl.BlockSpec(memory_space=pltpu.MemorySpace.VMEM)] * 2,
            out_specs=pl.BlockSpec(memory_space=pltpu.MemorySpace.VMEM),
            compiler_params=pltpu.CompilerParams(
                vmem_limit_bytes=_vmem_limit_bytes()),
        )(x, weight)

    if masked_wt is None:
        masked_wt = precompute_masked_weight(
            weight, n_delays=n_delays, top_k=top_k,
            out_dtype=compute_dtype if compute_dtype is not None else weight.dtype)
    x_c = x if compute_dtype is None else x.astype(compute_dtype)
    return _tiled_matmul(x_c, masked_wt, tm=tm, tn=tn, tk=tk,
                         out_dtype=out_dtype)


# -----------------------------------------------------------------------------
# Pure-JAX reference of the PyTorch forward (returns y and the masked weight).
# -----------------------------------------------------------------------------
def _reference(x, weight, n_delays, top_k):
    n_out, k = weight.shape
    n_input = k // n_delays
    w3 = weight.reshape(n_out, n_input, n_delays)
    _, idx = jax.lax.top_k(jnp.abs(w3), top_k)
    mask = jnp.sum(jax.nn.one_hot(idx, n_delays, dtype=jnp.float32), axis=2) > 0
    wm = jnp.where(mask, w3, 0.0).reshape(n_out, k)
    return x @ wm.T, wm


if __name__ == "__main__":
    key = jax.random.PRNGKey(0)

    # ---- Case 1: small shapes (module defaults) -> fused single-kernel path.
    n_delays, n_input, n_output, top_k, batch = 8, 16, 32, 3, 8
    in_features = n_input * n_delays                       # 128
    k1, k2, key = jax.random.split(key, 3)
    bound = 1.0 / math.sqrt(in_features)
    w_small = jax.random.uniform(k1, (n_output, in_features), jnp.float32,
                                 minval=-bound, maxval=bound)
    x_small = jax.random.normal(k2, (batch, in_features), jnp.float32)
    y_ref, _ = _reference(x_small, w_small, n_delays, top_k)

    y = jax.block_until_ready(
        delay_masking_linear(x_small, w_small, n_delays=n_delays, top_k=top_k))
    assert y.shape == (batch, n_output)
    assert jnp.allclose(y, y_ref, atol=2e-2, rtol=2e-2), "fused path mismatch"

    # ---- Case 2: larger, non-128-aligned shapes -> two-pass tiled path.
    n_delays2, n_input2, n_output2, top_k2, batch2 = 8, 48, 300, 3, 192
    in2 = n_input2 * n_delays2                             # 384
    k3, k4, key = jax.random.split(key, 3)
    bound2 = 1.0 / math.sqrt(in2)
    w_big = jax.random.uniform(k3, (n_output2, in2), jnp.float32,
                               minval=-bound2, maxval=bound2)
    x_big = jax.random.normal(k4, (batch2, in2), jnp.float32)
    y_ref2, wm_ref2 = _reference(x_big, w_big, n_delays2, top_k2)

    # Pass-1 masked weight must match the reference (purely elementwise op).
    wt = jax.block_until_ready(precompute_masked_weight(
        w_big, n_delays=n_delays2, top_k=top_k2))
    assert wt.shape == (in2, n_output2)
    assert jnp.allclose(wt, wm_ref2.T, atol=1e-6), "mask pass mismatch"

    y2 = jax.block_until_ready(delay_masking_linear(
        x_big, w_big, n_delays=n_delays2, top_k=top_k2, use_fused=False))
    assert y2.shape == (batch2, n_output2)
    assert jnp.allclose(y2, y_ref2, atol=2e-2, rtol=2e-2), "tiled f32 mismatch"

    # bf16-operand hot path (f32 accumulation) -- looser tolerance.
    y2b = jax.block_until_ready(delay_masking_linear(
        x_big, w_big, n_delays=n_delays2, top_k=top_k2, use_fused=False,
        compute_dtype=jnp.bfloat16))
    assert jnp.allclose(y2b, y_ref2, atol=6e-2, rtol=6e-2), "tiled bf16 mismatch"

    print("KERNEL_OK")
</pallas_src>

<mosaic_0001>
module attributes {stable_mosaic.version = 11 : i64} {
  func.func @_fused_kernel(%arg0: memref<8x128xf32, #tpu.memory_space<vmem>>, %arg1: memref<32x128xf32, #tpu.memory_space<vmem>>, %arg2: memref<8x32xf32, #tpu.memory_space<vmem>>) attributes {dimension_semantics = [], scalar_prefetch = 0 : i64, scratch_operands = 0 : i64, tpu.core_type = #tpu.core_type<tc>} {
    %c0 = arith.constant 0 : index
    %c0_0 = arith.constant 0 : index
    %0 = vector.load %arg1[%c0, %c0_0] : memref<32x128xf32, #tpu.memory_space<vmem>>, vector<32x128xf32>
    %1 = tpu.transpose %0, [1, 0] : vector<32x128xf32> -> vector<128x32xf32>
    %2 = vector.shape_cast %1 : vector<128x32xf32> to vector<16x8x32xf32>
    %3 = math.absf %2 : vector<16x8x32xf32>
    %c0_i32 = arith.constant 0 : i32
    %4 = vector.broadcast %c0_i32 : i32 to vector<16x32xi32>
    %c0_i32_1 = arith.constant 0 : i32
    %5 = vector.broadcast %c0_i32_1 : i32 to vector<16x32xi32>
    %c0_i32_2 = arith.constant 0 : i32
    %6 = vector.broadcast %c0_i32_2 : i32 to vector<16x32xi32>
    %c0_i32_3 = arith.constant 0 : i32
    %7 = vector.broadcast %c0_i32_3 : i32 to vector<16x32xi32>
    %c0_i32_4 = arith.constant 0 : i32
    %8 = vector.broadcast %c0_i32_4 : i32 to vector<16x32xi32>
    %c0_i32_5 = arith.constant 0 : i32
    %9 = vector.broadcast %c0_i32_5 : i32 to vector<16x32xi32>
    %c0_i32_6 = arith.constant 0 : i32
    %10 = vector.broadcast %c0_i32_6 : i32 to vector<16x32xi32>
    %c0_i32_7 = arith.constant 0 : i32
    %11 = vector.broadcast %c0_i32_7 : i32 to vector<16x32xi32>
    %12 = vector.extract_strided_slice %3 {offsets = [0, 0, 0], sizes = [16, 1, 32], strides = [1, 1, 1]} : vector<16x8x32xf32> to vector<16x1x32xf32>
    %13 = vector.shape_cast %12 : vector<16x1x32xf32> to vector<16x32xf32>
    %14 = vector.extract_strided_slice %3 {offsets = [0, 1, 0], sizes = [16, 1, 32], strides = [1, 1, 1]} : vector<16x8x32xf32> to vector<16x1x32xf32>
    %15 = vector.shape_cast %14 : vector<16x1x32xf32> to vector<16x32xf32>
    %16 = arith.cmpf oge, %13, %15 : vector<16x32xf32>
    %17 = arith.extui %16 : vector<16x32xi1> to vector<16x32xi32>
    %18 = arith.addi %5, %17 : vector<16x32xi32>
    %c1_i32 = arith.constant 1 : i32
    %19 = vector.broadcast %c1_i32 : i32 to vector<16x32xi32>
    %20 = arith.subi %19, %17 : vector<16x32xi32>
    %21 = arith.addi %4, %20 : vector<16x32xi32>
    %22 = vector.extract_strided_slice %3 {offsets = [0, 2, 0], sizes = [16, 1, 32], strides = [1, 1, 1]} : vector<16x8x32xf32> to vector<16x1x32xf32>
    %23 = vector.shape_cast %22 : vector<16x1x32xf32> to vector<16x32xf32>
    %24 = arith.cmpf oge, %13, %23 : vector<16x32xf32>
    %25 = arith.extui %24 : vector<16x32xi1> to vector<16x32xi32>
    %26 = arith.addi %6, %25 : vector<16x32xi32>
    %c1_i32_8 = arith.constant 1 : i32
    %27 = vector.broadcast %c1_i32_8 : i32 to vector<16x32xi32>
    %28 = arith.subi %27, %25 : vector<16x32xi32>
    %29 = arith.addi %21, %28 : vector<16x32xi32>
    %30 = vector.extract_strided_slice %3 {offsets = [0, 3, 0], sizes = [16, 1, 32], strides = [1, 1, 1]} : vector<16x8x32xf32> to vector<16x1x32xf32>
    %31 = vector.shape_cast %30 : vector<16x1x32xf32> to vector<16x32xf32>
    %32 = arith.cmpf oge, %13, %31 : vector<16x32xf32>
    %33 = arith.extui %32 : vector<16x32xi1> to vector<16x32xi32>
    %34 = arith.addi %7, %33 : vector<16x32xi32>
    %c1_i32_9 = arith.constant 1 : i32
    %35 = vector.broadcast %c1_i32_9 : i32 to vector<16x32xi32>
    %36 = arith.subi %35, %33 : vector<16x32xi32>
    %37 = arith.addi %29, %36 : vector<16x32xi32>
    %38 = vector.extract_strided_slice %3 {offsets = [0, 4, 0], sizes = [16, 1, 32], strides = [1, 1, 1]} : vector<16x8x32xf32> to vector<16x1x32xf32>
    %39 = vector.shape_cast %38 : vector<16x1x32xf32> to vector<16x32xf32>
    %40 = arith.cmpf oge, %13, %39 : vector<16x32xf32>
    %41 = arith.extui %40 : vector<16x32xi1> to vector<16x32xi32>
    %42 = arith.addi %8, %41 : vector<16x32xi32>
    %c1_i32_10 = arith.constant 1 : i32
    %43 = vector.broadcast %c1_i32_10 : i32 to vector<16x32xi32>
    %44 = arith.subi %43, %41 : vector<16x32xi32>
    %45 = arith.addi %37, %44 : vector<16x32xi32>
    %46 = vector.extract_strided_slice %3 {offsets = [0, 5, 0], sizes = [16, 1, 32], strides = [1, 1, 1]} : vector<16x8x32xf32> to vector<16x1x32xf32>
    %47 = vector.shape_cast %46 : vector<16x1x32xf32> to vector<16x32xf32>
    %48 = arith.cmpf oge, %13, %47 : vector<16x32xf32>
    %49 = arith.extui %48 : vector<16x32xi1> to vector<16x32xi32>
    %50 = arith.addi %9, %49 : vector<16x32xi32>
    %c1_i32_11 = arith.constant 1 : i32
    %51 = vector.broadcast %c1_i32_11 : i32 to vector<16x32xi32>
    %52 = arith.subi %51, %49 : vector<16x32xi32>
    %53 = arith.addi %45, %52 : vector<16x32xi32>
    %54 = vector.extract_strided_slice %3 {offsets = [0, 6, 0], sizes = [16, 1, 32], strides = [1, 1, 1]} : vector<16x8x32xf32> to vector<16x1x32xf32>
    %55 = vector.shape_cast %54 : vector<16x1x32xf32> to vector<16x32xf32>
    %56 = arith.cmpf oge, %13, %55 : vector<16x32xf32>
    %57 = arith.extui %56 : vector<16x32xi1> to vector<16x32xi32>
    %58 = arith.addi %10, %57 : vector<16x32xi32>
    %c1_i32_12 = arith.constant 1 : i32
    %59 = vector.broadcast %c1_i32_12 : i32 to vector<16x32xi32>
    %60 = arith.subi %59, %57 : vector<16x32xi32>
    %61 = arith.addi %53, %60 : vector<16x32xi32>
    %62 = vector.extract_strided_slice %3 {offsets = [0, 7, 0], sizes = [16, 1, 32], strides = [1, 1, 1]} : vector<16x8x32xf32> to vector<16x1x32xf32>
    %63 = vector.shape_cast %62 : vector<16x1x32xf32> to vector<16x32xf32>
    %64 = arith.cmpf oge, %13, %63 : vector<16x32xf32>
    %65 = arith.extui %64 : vector<16x32xi1> to vector<16x32xi32>
    %66 = arith.addi %11, %65 : vector<16x32xi32>
    %c1_i32_13 = arith.constant 1 : i32
    %67 = vector.broadcast %c1_i32_13 : i32 to vector<16x32xi32>
    %68 = arith.subi %67, %65 : vector<16x32xi32>
    %69 = arith.addi %61, %68 : vector<16x32xi32>
    %70 = vector.extract_strided_slice %3 {offsets = [0, 1, 0], sizes = [16, 1, 32], strides = [1, 1, 1]} : vector<16x8x32xf32> to vector<16x1x32xf32>
    %71 = vector.shape_cast %70 : vector<16x1x32xf32> to vector<16x32xf32>
    %72 = vector.extract_strided_slice %3 {offsets = [0, 2, 0], sizes = [16, 1, 32], strides = [1, 1, 1]} : vector<16x8x32xf32> to vector<16x1x32xf32>
    %73 = vector.shape_cast %72 : vector<16x1x32xf32> to vector<16x32xf32>
    %74 = arith.cmpf oge, %71, %73 : vector<16x32xf32>
    %75 = arith.extui %74 : vector<16x32xi1> to vector<16x32xi32>
    %76 = arith.addi %26, %75 : vector<16x32xi32>
    %c1_i32_14 = arith.constant 1 : i32
    %77 = vector.broadcast %c1_i32_14 : i32 to vector<16x32xi32>
    %78 = arith.subi %77, %75 : vector<16x32xi32>
    %79 = arith.addi %18, %78 : vector<16x32xi32>
    %80 = vector.extract_strided_slice %3 {offsets = [0, 3, 0], sizes = [16, 1, 32], strides = [1, 1, 1]} : vector<16x8x32xf32> to vector<16x1x32xf32>
    %81 = vector.shape_cast %80 : vector<16x1x32xf32> to vector<16x32xf32>
    %82 = arith.cmpf oge, %71, %81 : vector<16x32xf32>
    %83 = arith.extui %82 : vector<16x32xi1> to vector<16x32xi32>
    %84 = arith.addi %34, %83 : vector<16x32xi32>
    %c1_i32_15 = arith.constant 1 : i32
    %85 = vector.broadcast %c1_i32_15 : i32 to vector<16x32xi32>
    %86 = arith.subi %85, %83 : vector<16x32xi32>
    %87 = arith.addi %79, %86 : vector<16x32xi32>
    %88 = vector.extract_strided_slice %3 {offsets = [0, 4, 0], sizes = [16, 1, 32], strides = [1, 1, 1]} : vector<16x8x32xf32> to vector<16x1x32xf32>
    %89 = vector.shape_cast %88 : vector<16x1x32xf32> to vector<16x32xf32>
    %90 = arith.cmpf oge, %71, %89 : vector<16x32xf32>
    %91 = arith.extui %90 : vector<16x32xi1> to vector<16x32xi32>
    %92 = arith.addi %42, %91 : vector<16x32xi32>
    %c1_i32_16 = arith.constant 1 : i32
    %93 = vector.broadcast %c1_i32_16 : i32 to vector<16x32xi32>
    %94 = arith.subi %93, %91 : vector<16x32xi32>
    %95 = arith.addi %87, %94 : vector<16x32xi32>
    %96 = vector.extract_strided_slice %3 {offsets = [0, 5, 0], sizes = [16, 1, 32], strides = [1, 1, 1]} : vector<16x8x32xf32> to vector<16x1x32xf32>
    %97 = vector.shape_cast %96 : vector<16x1x32xf32> to vector<16x32xf32>
    %98 = arith.cmpf oge, %71, %97 : vector<16x32xf32>
    %99 = arith.extui %98 : vector<16x32xi1> to vector<16x32xi32>
    %100 = arith.addi %50, %99 : vector<16x32xi32>
    %c1_i32_17 = arith.constant 1 : i32
    %101 = vector.broadcast %c1_i32_17 : i32 to vector<16x32xi32>
    %102 = arith.subi %101, %99 : vector<16x32xi32>
    %103 = arith.addi %95, %102 : vector<16x32xi32>
    %104 = vector.extract_strided_slice %3 {offsets = [0, 6, 0], sizes = [16, 1, 32], strides = [1, 1, 1]} : vector<16x8x32xf32> to vector<16x1x32xf32>
    %105 = vector.shape_cast %104 : vector<16x1x32xf32> to vector<16x32xf32>
    %106 = arith.cmpf oge, %71, %105 : vector<16x32xf32>
    %107 = arith.extui %106 : vector<16x32xi1> to vector<16x32xi32>
    %108 = arith.addi %58, %107 : vector<16x32xi32>
    %c1_i32_18 = arith.constant 1 : i32
    %109 = vector.broadcast %c1_i32_18 : i32 to vector<16x32xi32>
    %110 = arith.subi %109, %107 : vector<16x32xi32>
    %111 = arith.addi %103, %110 : vector<16x32xi32>
    %112 = vector.extract_strided_slice %3 {offsets = [0, 7, 0], sizes = [16, 1, 32], strides = [1, 1, 1]} : vector<16x8x32xf32> to vector<16x1x32xf32>
    %113 = vector.shape_cast %112 : vector<16x1x32xf32> to vector<16x32xf32>
    %114 = arith.cmpf oge, %71, %113 : vector<16x32xf32>
    %115 = arith.extui %114 : vector<16x32xi1> to vector<16x32xi32>
    %116 = arith.addi %66, %115 : vector<16x32xi32>
    %c1_i32_19 = arith.constant 1 : i32
    %117 = vector.broadcast %c1_i32_19 : i32 to vector<16x32xi32>
    %118 = arith.subi %117, %115 : vector<16x32xi32>
    %119 = arith.addi %111, %118 : vector<16x32xi32>
    %120 = vector.extract_strided_slice %3 {offsets = [0, 2, 0], sizes = [16, 1, 32], strides = [1, 1, 1]} : vector<16x8x32xf32> to vector<16x1x32xf32>
    %121 = vector.shape_cast %120 : vector<16x1x32xf32> to vector<16x32xf32>
    %122 = vector.extract_strided_slice %3 {offsets = [0, 3, 0], sizes = [16, 1, 32], strides = [1, 1, 1]} : vector<16x8x32xf32> to vector<16x1x32xf32>
    %123 = vector.shape_cast %122 : vector<16x1x32xf32> to vector<16x32xf32>
    %124 = arith.cmpf oge, %121, %123 : vector<16x32xf32>
    %125 = arith.extui %124 : vector<16x32xi1> to vector<16x32xi32>
    %126 = arith.addi %84, %125 : vector<16x32xi32>
    %c1_i32_20 = arith.constant 1 : i32
    %127 = vector.broadcast %c1_i32_20 : i32 to vector<16x32xi32>
    %128 = arith.subi %127, %125 : vector<16x32xi32>
    %129 = arith.addi %76, %128 : vector<16x32xi32>
    %130 = vector.extract_strided_slice %3 {offsets = [0, 4, 0], sizes = [16, 1, 32], strides = [1, 1, 1]} : vector<16x8x32xf32> to vector<16x1x32xf32>
    %131 = vector.shape_cast %130 : vector<16x1x32xf32> to vector<16x32xf32>
    %132 = arith.cmpf oge, %121, %131 : vector<16x32xf32>
    %133 = arith.extui %132 : vector<16x32xi1> to vector<16x32xi32>
    %134 = arith.addi %92, %133 : vector<16x32xi32>
    %c1_i32_21 = arith.constant 1 : i32
    %135 = vector.broadcast %c1_i32_21 : i32 to vector<16x32xi32>
    %136 = arith.subi %135, %133 : vector<16x32xi32>
    %137 = arith.addi %129, %136 : vector<16x32xi32>
    %138 = vector.extract_strided_slice %3 {offsets = [0, 5, 0], sizes = [16, 1, 32], strides = [1, 1, 1]} : vector<16x8x32xf32> to vector<16x1x32xf32>
    %139 = vector.shape_cast %138 : vector<16x1x32xf32> to vector<16x32xf32>
    %140 = arith.cmpf oge, %121, %139 : vector<16x32xf32>
    %141 = arith.extui %140 : vector<16x32xi1> to vector<16x32xi32>
    %142 = arith.addi %100, %141 : vector<16x32xi32>
    %c1_i32_22 = arith.constant 1 : i32
    %143 = vector.broadcast %c1_i32_22 : i32 to vector<16x32xi32>
    %144 = arith.subi %143, %141 : vector<16x32xi32>
    %145 = arith.addi %137, %144 : vector<16x32xi32>
    %146 = vector.extract_strided_slice %3 {offsets = [0, 6, 0], sizes = [16, 1, 32], strides = [1, 1, 1]} : vector<16x8x32xf32> to vector<16x1x32xf32>
    %147 = vector.shape_cast %146 : vector<16x1x32xf32> to vector<16x32xf32>
    %148 = arith.cmpf oge, %121, %147 : vector<16x32xf32>
    %149 = arith.extui %148 : vector<16x32xi1> to vector<16x32xi32>
    %150 = arith.addi %108, %149 : vector<16x32xi32>
    %c1_i32_23 = arith.constant 1 : i32
    %151 = vector.broadcast %c1_i32_23 : i32 to vector<16x32xi32>
    %152 = arith.subi %151, %149 : vector<16x32xi32>
    %153 = arith.addi %145, %152 : vector<16x32xi32>
    %154 = vector.extract_strided_slice %3 {offsets = [0, 7, 0], sizes = [16, 1, 32], strides = [1, 1, 1]} : vector<16x8x32xf32> to vector<16x1x32xf32>
    %155 = vector.shape_cast %154 : vector<16x1x32xf32> to vector<16x32xf32>
    %156 = arith.cmpf oge, %121, %155 : vector<16x32xf32>
    %157 = arith.extui %156 : vector<16x32xi1> to vector<16x32xi32>
    %158 = arith.addi %116, %157 : vector<16x32xi32>
    %c1_i32_24 = arith.constant 1 : i32
    %159 = vector.broadcast %c1_i32_24 : i32 to vector<16x32xi32>
    %160 = arith.subi %159, %157 : vector<16x32xi32>
    %161 = arith.addi %153, %160 : vector<16x32xi32>
    %162 = vector.extract_strided_slice %3 {offsets = [0, 3, 0], sizes = [16, 1, 32], strides = [1, 1, 1]} : vector<16x8x32xf32> to vector<16x1x32xf32>
    %163 = vector.shape_cast %162 : vector<16x1x32xf32> to vector<16x32xf32>
    %164 = vector.extract_strided_slice %3 {offsets = [0, 4, 0], sizes = [16, 1, 32], strides = [1, 1, 1]} : vector<16x8x32xf32> to vector<16x1x32xf32>
    %165 = vector.shape_cast %164 : vector<16x1x32xf32> to vector<16x32xf32>
    %166 = arith.cmpf oge, %163, %165 : vector<16x32xf32>
    %167 = arith.extui %166 : vector<16x32xi1> to vector<16x32xi32>
    %168 = arith.addi %134, %167 : vector<16x32xi32>
    %c1_i32_25 = arith.constant 1 : i32
    %169 = vector.broadcast %c1_i32_25 : i32 to vector<16x32xi32>
    %170 = arith.subi %169, %167 : vector<16x32xi32>
    %171 = arith.addi %126, %170 : vector<16x32xi32>
    %172 = vector.extract_strided_slice %3 {offsets = [0, 5, 0], sizes = [16, 1, 32], strides = [1, 1, 1]} : vector<16x8x32xf32> to vector<16x1x32xf32>
    %173 = vector.shape_cast %172 : vector<16x1x32xf32> to vector<16x32xf32>
    %174 = arith.cmpf oge, %163, %173 : vector<16x32xf32>
    %175 = arith.extui %174 : vector<16x32xi1> to vector<16x32xi32>
    %176 = arith.addi %142, %175 : vector<16x32xi32>
    %c1_i32_26 = arith.constant 1 : i32
    %177 = vector.broadcast %c1_i32_26 : i32 to vector<16x32xi32>
    %178 = arith.subi %177, %175 : vector<16x32xi32>
    %179 = arith.addi %171, %178 : vector<16x32xi32>
    %180 = vector.extract_strided_slice %3 {offsets = [0, 6, 0], sizes = [16, 1, 32], strides = [1, 1, 1]} : vector<16x8x32xf32> to vector<16x1x32xf32>
    %181 = vector.shape_cast %180 : vector<16x1x32xf32> to vector<16x32xf32>
    %182 = arith.cmpf oge, %163, %181 : vector<16x32xf32>
    %183 = arith.extui %182 : vector<16x32xi1> to vector<16x32xi32>
    %184 = arith.addi %150, %183 : vector<16x32xi32>
    %c1_i32_27 = arith.constant 1 : i32
    %185 = vector.broadcast %c1_i32_27 : i32 to vector<16x32xi32>
    %186 = arith.subi %185, %183 : vector<16x32xi32>
    %187 = arith.addi %179, %186 : vector<16x32xi32>
    %188 = vector.extract_strided_slice %3 {offsets = [0, 7, 0], sizes = [16, 1, 32], strides = [1, 1, 1]} : vector<16x8x32xf32> to vector<16x1x32xf32>
    %189 = vector.shape_cast %188 : vector<16x1x32xf32> to vector<16x32xf32>
    %190 = arith.cmpf oge, %163, %189 : vector<16x32xf32>
    %191 = arith.extui %190 : vector<16x32xi1> to vector<16x32xi32>
    %192 = arith.addi %158, %191 : vector<16x32xi32>
    %c1_i32_28 = arith.constant 1 : i32
    %193 = vector.broadcast %c1_i32_28 : i32 to vector<16x32xi32>
    %194 = arith.subi %193, %191 : vector<16x32xi32>
    %195 = arith.addi %187, %194 : vector<16x32xi32>
    %196 = vector.extract_strided_slice %3 {offsets = [0, 4, 0], sizes = [16, 1, 32], strides = [1, 1, 1]} : vector<16x8x32xf32> to vector<16x1x32xf32>
    %197 = vector.shape_cast %196 : vector<16x1x32xf32> to vector<16x32xf32>
    %198 = vector.extract_strided_slice %3 {offsets = [0, 5, 0], sizes = [16, 1, 32], strides = [1, 1, 1]} : vector<16x8x32xf32> to vector<16x1x32xf32>
    %199 = vector.shape_cast %198 : vector<16x1x32xf32> to vector<16x32xf32>
    %200 = arith.cmpf oge, %197, %199 : vector<16x32xf32>
    %201 = arith.extui %200 : vector<16x32xi1> to vector<16x32xi32>
    %202 = arith.addi %176, %201 : vector<16x32xi32>
    %c1_i32_29 = arith.constant 1 : i32
    %203 = vector.broadcast %c1_i32_29 : i32 to vector<16x32xi32>
    %204 = arith.subi %203, %201 : vector<16x32xi32>
    %205 = arith.addi %168, %204 : vector<16x32xi32>
    %206 = vector.extract_strided_slice %3 {offsets = [0, 6, 0], sizes = [16, 1, 32], strides = [1, 1, 1]} : vector<16x8x32xf32> to vector<16x1x32xf32>
    %207 = vector.shape_cast %206 : vector<16x1x32xf32> to vector<16x32xf32>
    %208 = arith.cmpf oge, %197, %207 : vector<16x32xf32>
    %209 = arith.extui %208 : vector<16x32xi1> to vector<16x32xi32>
    %210 = arith.addi %184, %209 : vector<16x32xi32>
    %c1_i32_30 = arith.constant 1 : i32
    %211 = vector.broadcast %c1_i32_30 : i32 to vector<16x32xi32>
    %212 = arith.subi %211, %209 : vector<16x32xi32>
    %213 = arith.addi %205, %212 : vector<16x32xi32>
    %214 = vector.extract_strided_slice %3 {offsets = [0, 7, 0], sizes = [16, 1, 32], strides = [1, 1, 1]} : vector<16x8x32xf32> to vector<16x1x32xf32>
    %215 = vector.shape_cast %214 : vector<16x1x32xf32> to vector<16x32xf32>
    %216 = arith.cmpf oge, %197, %215 : vector<16x32xf32>
    %217 = arith.extui %216 : vector<16x32xi1> to vector<16x32xi32>
    %218 = arith.addi %192, %217 : vector<16x32xi32>
    %c1_i32_31 = arith.constant 1 : i32
    %219 = vector.broadcast %c1_i32_31 : i32 to vector<16x32xi32>
    %220 = arith.subi %219, %217 : vector<16x32xi32>
    %221 = arith.addi %213, %220 : vector<16x32xi32>
    %222 = vector.extract_strided_slice %3 {offsets = [0, 5, 0], sizes = [16, 1, 32], strides = [1, 1, 1]} : vector<16x8x32xf32> to vector<16x1x32xf32>
    %223 = vector.shape_cast %222 : vector<16x1x32xf32> to vector<16x32xf32>
    %224 = vector.extract_strided_slice %3 {offsets = [0, 6, 0], sizes = [16, 1, 32], strides = [1, 1, 1]} : vector<16x8x32xf32> to vector<16x1x32xf32>
    %225 = vector.shape_cast %224 : vector<16x1x32xf32> to vector<16x32xf32>
    %226 = arith.cmpf oge, %223, %225 : vector<16x32xf32>
    %227 = arith.extui %226 : vector<16x32xi1> to vector<16x32xi32>
    %228 = arith.addi %210, %227 : vector<16x32xi32>
    %c1_i32_32 = arith.constant 1 : i32
    %229 = vector.broadcast %c1_i32_32 : i32 to vector<16x32xi32>
    %230 = arith.subi %229, %227 : vector<16x32xi32>
    %231 = arith.addi %202, %230 : vector<16x32xi32>
    %232 = vector.extract_strided_slice %3 {offsets = [0, 7, 0], sizes = [16, 1, 32], strides = [1, 1, 1]} : vector<16x8x32xf32> to vector<16x1x32xf32>
    %233 = vector.shape_cast %232 : vector<16x1x32xf32> to vector<16x32xf32>
    %234 = arith.cmpf oge, %223, %233 : vector<16x32xf32>
    %235 = arith.extui %234 : vector<16x32xi1> to vector<16x32xi32>
    %236 = arith.addi %218, %235 : vector<16x32xi32>
    %c1_i32_33 = arith.constant 1 : i32
    %237 = vector.broadcast %c1_i32_33 : i32 to vector<16x32xi32>
    %238 = arith.subi %237, %235 : vector<16x32xi32>
    %239 = arith.addi %231, %238 : vector<16x32xi32>
    %240 = vector.extract_strided_slice %3 {offsets = [0, 6, 0], sizes = [16, 1, 32], strides = [1, 1, 1]} : vector<16x8x32xf32> to vector<16x1x32xf32>
    %241 = vector.shape_cast %240 : vector<16x1x32xf32> to vector<16x32xf32>
    %242 = vector.extract_strided_slice %3 {offsets = [0, 7, 0], sizes = [16, 1, 32], strides = [1, 1, 1]} : vector<16x8x32xf32> to vector<16x1x32xf32>
    %243 = vector.shape_cast %242 : vector<16x1x32xf32> to vector<16x32xf32>
    %244 = arith.cmpf oge, %241, %243 : vector<16x32xf32>
    %245 = arith.extui %244 : vector<16x32xi1> to vector<16x32xi32>
    %246 = arith.addi %236, %245 : vector<16x32xi32>
    %c1_i32_34 = arith.constant 1 : i32
    %247 = vector.broadcast %c1_i32_34 : i32 to vector<16x32xi32>
    %248 = arith.subi %247, %245 : vector<16x32xi32>
    %249 = arith.addi %228, %248 : vector<16x32xi32>
    %250 = vector.shape_cast %69 : vector<16x32xi32> to vector<16x1x32xi32>
    %251 = vector.shape_cast %119 : vector<16x32xi32> to vector<16x1x32xi32>
    %252 = vector.shape_cast %161 : vector<16x32xi32> to vector<16x1x32xi32>
    %253 = vector.shape_cast %195 : vector<16x32xi32> to vector<16x1x32xi32>
    %254 = vector.shape_cast %221 : vector<16x32xi32> to vector<16x1x32xi32>
    %255 = vector.shape_cast %239 : vector<16x32xi32> to vector<16x1x32xi32>
    %256 = vector.shape_cast %249 : vector<16x32xi32> to vector<16x1x32xi32>
    %257 = vector.shape_cast %246 : vector<16x32xi32> to vector<16x1x32xi32>
    %258 = tpu.concatenate %250, %251, %252, %253, %254, %255, %256, %257 in 1 : vector<16x1x32xi32>, vector<16x1x32xi32>, vector<16x1x32xi32>, vector<16x1x32xi32>, vector<16x1x32xi32>, vector<16x1x32xi32>, vector<16x1x32xi32>, vector<16x1x32xi32> -> vector<16x8x32xi32>
    %c3_i32 = arith.constant 3 : i32
    %259 = vector.broadcast %c3_i32 : i32 to vector<16x8x32xi32>
    %260 = arith.cmpi slt, %258, %259 : vector<16x8x32xi32>
    %cst = arith.constant 0.000000e+00 : f32
    %261 = vector.broadcast %cst : f32 to vector<16x8x32xf32>
    %262 = arith.select %260, %2, %261 : vector<16x8x32xi1>, vector<16x8x32xf32>
    %263 = vector.shape_cast %262 : vector<16x8x32xf32> to vector<128x32xf32>
    %c0_35 = arith.constant 0 : index
    %c0_36 = arith.constant 0 : index
    %264 = vector.load %arg0[%c0_35, %c0_36] : memref<8x128xf32, #tpu.memory_space<vmem>>, vector<8x128xf32>
    %cst_37 = arith.constant dense<0.000000e+00> : vector<8x32xf32>
    %265 = tpu.matmul %264, %263, %cst_37 {dimension_numbers = #tpu.dot_dimension_numbers<[1], [0], [0], [1], [0, 0, 1, 1], [], []>} : vector<8x128xf32>, vector<128x32xf32>, vector<8x32xf32> -> vector<8x32xf32>
    %c0_38 = arith.constant 0 : index
    %c0_39 = arith.constant 0 : index
    %266 = vector.load %arg2[%c0_38, %c0_39] : memref<8x32xf32, #tpu.memory_space<vmem>>, vector<8x32xf32>
    tpu.vector_store %arg2[%c0_38, %c0_39], %265 {strides = array<i32>} : memref<8x32xf32, #tpu.memory_space<vmem>>, vector<8x32xf32>,
    return
  }
}

</mosaic_0001>

<llo_original>
// kernel: tpu_custom_call.1
$region0: #{tpu_custom_call.1}
  #allocation0 [shape = 'u32[]', space=smem, size = 0x4, offset = 0x4, fixed_abs, tag = 'smem constant byte address 0x4 - core index']
  #allocation1 [shape = 'u32[144,128]{1,0:T(1,128)}', space=vmem, size = 0x12000, scoped, tag = 'internal scratch']
  %s0 = inlined_call_operand.hbm [shape: f32[8,128], index: 0, kind: input, shape index: {}]
  %s1 = inlined_call_operand.hbm [shape: f32[32,128], index: 1, kind: input, shape index: {}]
  %s2 = inlined_call_operand.hbm [shape: f32[8,32], index: 2, kind: output, shape index: {}]
  %s3 = sld [smem:[#allocation0]]
  $region26: #{tpu_custom_call.1} parent=0
    _
  %s5 = ssub.s32 1, %s3
  %s6 = scalar_select 0, %s5, %s3
  $region1: #{tpu_custom_call.1} parent=0
    #allocation2 [shape = 'u8[4096]{0}', space=vmem, size = 0x1000, scoped, tag = 'input window, operand 0, single buffered']
    #allocation3 [shape = 's32[1]{0}', space=sflag, size = 0x4, scoped, tag = 'scoped memory for tpu_custom_call.1']
    #allocation4 [shape = 's32[1]{0}', space=sflag, size = 0x4, scoped, tag = 'scoped memory for tpu_custom_call.1']
    #allocation5 [shape = 'u8[16384]{0}', space=vmem, size = 0x4000, scoped, tag = 'input window, operand 1, single buffered']
    #allocation6 [shape = 's32[1]{0}', space=sflag, size = 0x4, scoped, tag = 'scoped memory for tpu_custom_call.1']
    #allocation7 [shape = 'u8[4096]{0}', space=vmem, size = 0x1000, scoped, tag = 'output window, operand 0, single buffered']
    %7 = vsyncpa [#allocation3], 0
    %8 = vsyncpa [#allocation6], 0
    %9 = vsyncpa [#allocation4], 0
    // Predicated region
    $region2: #{tpu_custom_call.1} parent=1 // pred_check
      _
    $region3: #{tpu_custom_call.1} parent=1 // pred_check_branch
      %11 = sbr.rel (0) target = $region5
    $region4: #{tpu_custom_call.1} parent=1 // pred_region
      %s13 = ssub.s32 128, 128
      %14 = vsyncadd [#allocation3], %s13
      %s16 = sshll.u32 [#allocation2], 4
      %s17 = int_to_ptr.vmem [resolvable:$true] %s16
      %19 = dma.hbm_to_vmem [thread:$0]  %s0, 128, %s17, [#allocation3]
    $region5: #{tpu_custom_call.1} parent=1 // pred_fallthru
      _
    // Predicated region
    $region6: #{tpu_custom_call.1} parent=1 // pred_check
      _
    $region7: #{tpu_custom_call.1} parent=1 // pred_check_branch
      %21 = sbr.rel (0) target = $region9
    $region8: #{tpu_custom_call.1} parent=1 // pred_region
      %s23 = ssub.s32 512, 512
      %24 = vsyncadd [#allocation6], %s23
      %s25 = sshll.u32 [#allocation5], 4
      %s26 = int_to_ptr.vmem [resolvable:$true] %s25
      %31 = dma.hbm_to_vmem [thread:$0]  %s1, 512, %s26, [#allocation6], 128, 128, 8
    $region9: #{tpu_custom_call.1} parent=1 // pred_fallthru
      _
    // Predicated region
    $region10: #{tpu_custom_call.1} parent=1 // pred_check
      _
    $region11: #{tpu_custom_call.1} parent=1 // pred_check_branch
      %33 = sbr.rel (0) target = $region13
    $region12: #{tpu_custom_call.1} parent=1 // pred_region
      %34 = dma.done [#allocation3], 128
    $region13: #{tpu_custom_call.1} parent=1 // pred_fallthru
      _
    // Predicated region
    $region14: #{tpu_custom_call.1} parent=1 // pred_check
      _
    $region15: #{tpu_custom_call.1} parent=1 // pred_check_branch
      %36 = sbr.rel (0) target = $region17
    $region16: #{tpu_custom_call.1} parent=1 // pred_region
      %37 = dma.done [#allocation6], 512
    $region17: #{tpu_custom_call.1} parent=1 // pred_fallthru
      _
    %v38 = vld [vmem:[#allocation5] sm:$0xff]
    %v39 = vld [vmem:[#allocation5 + $0x8] sm:$0xff]
    %v40 = vld [vmem:[#allocation5 + $0x10] sm:$0xff]
    %v41 = vld [vmem:[#allocation5 + $0x18] sm:$0xff]
    %42 = vxpose.xlu0.b32.start [1/16] %v38, 128
    %43 = vxpose.xlu0.b32.cont [2/16] %v39, 128
    %44 = vxpose.xlu0.b32.cont [3/16] %v40, 128
    %45 = vxpose.xlu0.b32.cont [4/16] %v41, 128
    %46 = vxpose.xlu0.b32.cont [5/16] 0.0, 128
    %47 = vxpose.xlu0.b32.cont [6/16] 0.0, 128
    %48 = vxpose.xlu0.b32.cont [7/16] 0.0, 128
    %49 = vxpose.xlu0.b32.cont [8/16] 0.0, 128
    %50 = vxpose.xlu0.b32.cont [9/16] 0.0, 128
    %51 = vxpose.xlu0.b32.cont [10/16] 0.0, 128
    %52 = vxpose.xlu0.b32.cont [11/16] 0.0, 128
    %53 = vxpose.xlu0.b32.cont [12/16] 0.0, 128
    %54 = vxpose.xlu0.b32.cont [13/16] 0.0, 128
    %55 = vxpose.xlu0.b32.cont [14/16] 0.0, 128
    %56 = vxpose.xlu0.b32.cont [15/16] 0.0, 128
    %57 = vxpose.xlu0.b32.end [16/16] 0.0, 128
    %v58 = vpop.trf.xlu0
    %v59 = vpop.trf.xlu0
    %v60 = vpop.trf.xlu0
    %v61 = vpop.trf.xlu0
    %v62 = vpop.trf.xlu0
    %v63 = vpop.trf.xlu0
    %v64 = vpop.trf.xlu0
    %v65 = vpop.trf.xlu0
    %v66 = vpop.trf.xlu0
    %v67 = vpop.trf.xlu0
    %v68 = vpop.trf.xlu0
    %v69 = vpop.trf.xlu0
    %v70 = vpop.trf.xlu0
    %v71 = vpop.trf.xlu0
    %v72 = vpop.trf.xlu0
    %v73 = vpop.trf.xlu0
    %v74 = vand.u32 2147483647, %v58
    %v75 = vand.u32 2147483647, %v59
    %v76 = vand.u32 2147483647, %v60
    %v77 = vand.u32 2147483647, %v61
    %v78 = vand.u32 2147483647, %v62
    %v79 = vand.u32 2147483647, %v63
    %v80 = vand.u32 2147483647, %v64
    %v81 = vand.u32 2147483647, %v65
    %v82 = vand.u32 2147483647, %v66
    %v83 = vand.u32 2147483647, %v67
    %v84 = vand.u32 2147483647, %v68
    %v85 = vand.u32 2147483647, %v69
    %v86 = vand.u32 2147483647, %v70
    %v87 = vand.u32 2147483647, %v71
    %v88 = vand.u32 2147483647, %v72
    %v89 = vand.u32 2147483647, %v73
    %v106 = vrot.slane %v74, 1
    %v107 = vrot.slane %v75, 1
    %v108 = vrot.slane %v76, 1
    %v109 = vrot.slane %v77, 1
    %v110 = vrot.slane %v78, 1
    %v111 = vrot.slane %v79, 1
    %v112 = vrot.slane %v80, 1
    %v113 = vrot.slane %v81, 1
    %v114 = vrot.slane %v82, 1
    %v115 = vrot.slane %v83, 1
    %v116 = vrot.slane %v84, 1
    %v117 = vrot.slane %v85, 1
    %v118 = vrot.slane %v86, 1
    %v119 = vrot.slane %v87, 1
    %v120 = vrot.slane %v88, 1
    %v121 = vrot.slane %v89, 1
    %vm138 = vcmp.ge.f32.partialorder %v74, %v106
    %vm139 = vcmp.ge.f32.partialorder %v75, %v107
    %vm140 = vcmp.ge.f32.partialorder %v76, %v108
    %vm141 = vcmp.ge.f32.partialorder %v77, %v109
    %vm142 = vcmp.ge.f32.partialorder %v78, %v110
    %vm143 = vcmp.ge.f32.partialorder %v79, %v111
    %vm144 = vcmp.ge.f32.partialorder %v80, %v112
    %vm145 = vcmp.ge.f32.partialorder %v81, %v113
    %vm146 = vcmp.ge.f32.partialorder %v82, %v114
    %vm147 = vcmp.ge.f32.partialorder %v83, %v115
    %vm148 = vcmp.ge.f32.partialorder %v84, %v116
    %vm149 = vcmp.ge.f32.partialorder %v85, %v117
    %vm150 = vcmp.ge.f32.partialorder %v86, %v118
    %vm151 = vcmp.ge.f32.partialorder %v87, %v119
    %vm152 = vcmp.ge.f32.partialorder %v88, %v120
    %vm153 = vcmp.ge.f32.partialorder %v89, %v121
    %v154 = vsel %vm138, 1, 0
    %v155 = vsel %vm139, 1, 0
    %v156 = vsel %vm140, 1, 0
    %v157 = vsel %vm141, 1, 0
    %v158 = vsel %vm142, 1, 0
    %v159 = vsel %vm143, 1, 0
    %v160 = vsel %vm144, 1, 0
    %v161 = vsel %vm145, 1, 0
    %v162 = vsel %vm146, 1, 0
    %v163 = vsel %vm147, 1, 0
    %v164 = vsel %vm148, 1, 0
    %v165 = vsel %vm149, 1, 0
    %v166 = vsel %vm150, 1, 0
    %v167 = vsel %vm151, 1, 0
    %v168 = vsel %vm152, 1, 0
    %v169 = vsel %vm153, 1, 0
    %v170 = vsub.s32 1, %v154
    %v171 = vsub.s32 1, %v155
    %v172 = vsub.s32 1, %v156
    %v173 = vsub.s32 1, %v157
    %v174 = vsub.s32 1, %v158
    %v175 = vsub.s32 1, %v159
    %v176 = vsub.s32 1, %v160
    %v177 = vsub.s32 1, %v161
    %v178 = vsub.s32 1, %v162
    %v179 = vsub.s32 1, %v163
    %v180 = vsub.s32 1, %v164
    %v181 = vsub.s32 1, %v165
    %v182 = vsub.s32 1, %v166
    %v183 = vsub.s32 1, %v167
    %v184 = vsub.s32 1, %v168
    %v185 = vsub.s32 1, %v169
    %v186 = vrot.slane %v74, 2
    %v187 = vrot.slane %v75, 2
    %v188 = vrot.slane %v76, 2
    %v189 = vrot.slane %v77, 2
    %v190 = vrot.slane %v78, 2
    %v191 = vrot.slane %v79, 2
    %v192 = vrot.slane %v80, 2
    %v193 = vrot.slane %v81, 2
    %v194 = vrot.slane %v82, 2
    %v195 = vrot.slane %v83, 2
    %v196 = vrot.slane %v84, 2
    %v197 = vrot.slane %v85, 2
    %v198 = vrot.slane %v86, 2
    %v199 = vrot.slane %v87, 2
    %v200 = vrot.slane %v88, 2
    %v201 = vrot.slane %v89, 2
    %vm218 = vcmp.ge.f32.partialorder %v74, %v186
    %vm219 = vcmp.ge.f32.partialorder %v75, %v187
    %vm220 = vcmp.ge.f32.partialorder %v76, %v188
    %vm221 = vcmp.ge.f32.partialorder %v77, %v189
    %vm222 = vcmp.ge.f32.partialorder %v78, %v190
    %vm223 = vcmp.ge.f32.partialorder %v79, %v191
    %vm224 = vcmp.ge.f32.partialorder %v80, %v192
    %vm225 = vcmp.ge.f32.partialorder %v81, %v193
    %vm226 = vcmp.ge.f32.partialorder %v82, %v194
    %vm227 = vcmp.ge.f32.partialorder %v83, %v195
    %vm228 = vcmp.ge.f32.partialorder %v84, %v196
    %vm229 = vcmp.ge.f32.partialorder %v85, %v197
    %vm230 = vcmp.ge.f32.partialorder %v86, %v198
    %vm231 = vcmp.ge.f32.partialorder %v87, %v199
    %vm232 = vcmp.ge.f32.partialorder %v88, %v200
    %vm233 = vcmp.ge.f32.partialorder %v89, %v201
    %v234 = vsel %vm218, 1, 0
    %v235 = vsel %vm219, 1, 0
    %v236 = vsel %vm220, 1, 0
    %v237 = vsel %vm221, 1, 0
    %v238 = vsel %vm222, 1, 0
    %v239 = vsel %vm223, 1, 0
    %v240 = vsel %vm224, 1, 0
    %v241 = vsel %vm225, 1, 0
    %v242 = vsel %vm226, 1, 0
    %v243 = vsel %vm227, 1, 0
    %v244 = vsel %vm228, 1, 0
    %v245 = vsel %vm229, 1, 0
    %v246 = vsel %vm230, 1, 0
    %v247 = vsel %vm231, 1, 0
    %v248 = vsel %vm232, 1, 0
    %v249 = vsel %vm233, 1, 0
    %v250 = vsub.s32 1, %v234
    %v251 = vsub.s32 1, %v235
    %v252 = vsub.s32 1, %v236
    %v253 = vsub.s32 1, %v237
    %v254 = vsub.s32 1, %v238
    %v255 = vsub.s32 1, %v239
    %v256 = vsub.s32 1, %v240
    %v257 = vsub.s32 1, %v241
    %v258 = vsub.s32 1, %v242
    %v259 = vsub.s32 1, %v243
    %v260 = vsub.s32 1, %v244
    %v261 = vsub.s32 1, %v245
    %v262 = vsub.s32 1, %v246
    %v263 = vsub.s32 1, %v247
    %v264 = vsub.s32 1, %v248
    %v265 = vsub.s32 1, %v249
    %v266 = vadd.s32 %v170, %v250
    %v267 = vadd.s32 %v171, %v251
    %v268 = vadd.s32 %v172, %v252
    %v269 = vadd.s32 %v173, %v253
    %v270 = vadd.s32 %v174, %v254
    %v271 = vadd.s32 %v175, %v255
    %v272 = vadd.s32 %v176, %v256
    %v273 = vadd.s32 %v177, %v257
    %v274 = vadd.s32 %v178, %v258
    %v275 = vadd.s32 %v179, %v259
    %v276 = vadd.s32 %v180, %v260
    %v277 = vadd.s32 %v181, %v261
    %v278 = vadd.s32 %v182, %v262
    %v279 = vadd.s32 %v183, %v263
    %v280 = vadd.s32 %v184, %v264
    %v281 = vadd.s32 %v185, %v265
    %v282 = vrot.slane %v74, 3
    %v283 = vrot.slane %v75, 3
    %v284 = vrot.slane %v76, 3
    %v285 = vrot.slane %v77, 3
    %v286 = vrot.slane %v78, 3
    %v287 = vrot.slane %v79, 3
    %v288 = vrot.slane %v80, 3
    %v289 = vrot.slane %v81, 3
    %v290 = vrot.slane %v82, 3
    %v291 = vrot.slane %v83, 3
    %v292 = vrot.slane %v84, 3
    %v293 = vrot.slane %v85, 3
    %v294 = vrot.slane %v86, 3
    %v295 = vrot.slane %v87, 3
    %v296 = vrot.slane %v88, 3
    %v297 = vrot.slane %v89, 3
    %vm314 = vcmp.ge.f32.partialorder %v74, %v282
    %vm315 = vcmp.ge.f32.partialorder %v75, %v283
    %vm316 = vcmp.ge.f32.partialorder %v76, %v284
    %vm317 = vcmp.ge.f32.partialorder %v77, %v285
    %vm318 = vcmp.ge.f32.partialorder %v78, %v286
    %vm319 = vcmp.ge.f32.partialorder %v79, %v287
    %vm320 = vcmp.ge.f32.partialorder %v80, %v288
    %vm321 = vcmp.ge.f32.partialorder %v81, %v289
    %vm322 = vcmp.ge.f32.partialorder %v82, %v290
    %vm323 = vcmp.ge.f32.partialorder %v83, %v291
    %vm324 = vcmp.ge.f32.partialorder %v84, %v292
    %vm325 = vcmp.ge.f32.partialorder %v85, %v293
    %vm326 = vcmp.ge.f32.partialorder %v86, %v294
    %vm327 = vcmp.ge.f32.partialorder %v87, %v295
    %vm328 = vcmp.ge.f32.partialorder %v88, %v296
    %vm329 = vcmp.ge.f32.partialorder %v89, %v297
    %v330 = vsel %vm314, 1, 0
    %v331 = vsel %vm315, 1, 0
    %v332 = vsel %vm316, 1, 0
    %v333 = vsel %vm317, 1, 0
    %v334 = vsel %vm318, 1, 0
    %v335 = vsel %vm319, 1, 0
    %v336 = vsel %vm320, 1, 0
    %v337 = vsel %vm321, 1, 0
    %v338 = vsel %vm322, 1, 0
    %v339 = vsel %vm323, 1, 0
    %v340 = vsel %vm324, 1, 0
    %v341 = vsel %vm325, 1, 0
    %v342 = vsel %vm326, 1, 0
    %v343 = vsel %vm327, 1, 0
    %v344 = vsel %vm328, 1, 0
    %v345 = vsel %vm329, 1, 0
    %v346 = vsub.s32 1, %v330
    %v347 = vsub.s32 1, %v331
    %v348 = vsub.s32 1, %v332
    %v349 = vsub.s32 1, %v333
    %v350 = vsub.s32 1, %v334
    %v351 = vsub.s32 1, %v335
    %v352 = vsub.s32 1, %v336
    %v353 = vsub.s32 1, %v337
    %v354 = vsub.s32 1, %v338
    %v355 = vsub.s32 1, %v339
    %v356 = vsub.s32 1, %v340
    %v357 = vsub.s32 1, %v341
    %v358 = vsub.s32 1, %v342
    %v359 = vsub.s32 1, %v343
    %v360 = vsub.s32 1, %v344
    %v361 = vsub.s32 1, %v345
    %v362 = vadd.s32 %v266, %v346
    %v363 = vadd.s32 %v267, %v347
    %v364 = vadd.s32 %v268, %v348
    %v365 = vadd.s32 %v269, %v349
    %v366 = vadd.s32 %v270, %v350
    %v367 = vadd.s32 %v271, %v351
    %v368 = vadd.s32 %v272, %v352
    %v369 = vadd.s32 %v273, %v353
    %v370 = vadd.s32 %v274, %v354
    %v371 = vadd.s32 %v275, %v355
    %v372 = vadd.s32 %v276, %v356
    %v373 = vadd.s32 %v277, %v357
    %v374 = vadd.s32 %v278, %v358
    %v375 = vadd.s32 %v279, %v359
    %v376 = vadd.s32 %v280, %v360
    %v377 = vadd.s32 %v281, %v361
    %v378 = vrot.slane %v74, 4
    %v379 = vrot.slane %v75, 4
    %v380 = vrot.slane %v76, 4
    %v381 = vrot.slane %v77, 4
    %v382 = vrot.slane %v78, 4
    %v383 = vrot.slane %v79, 4
    %v384 = vrot.slane %v80, 4
    %v385 = vrot.slane %v81, 4
    %v386 = vrot.slane %v82, 4
    %v387 = vrot.slane %v83, 4
    %v388 = vrot.slane %v84, 4
    %v389 = vrot.slane %v85, 4
    %v390 = vrot.slane %v86, 4
    %v391 = vrot.slane %v87, 4
    %v392 = vrot.slane %v88, 4
    %v393 = vrot.slane %v89, 4
    %vm410 = vcmp.ge.f32.partialorder %v74, %v378
    %vm411 = vcmp.ge.f32.partialorder %v75, %v379
    %vm412 = vcmp.ge.f32.partialorder %v76, %v380
    %vm413 = vcmp.ge.f32.partialorder %v77, %v381
    %vm414 = vcmp.ge.f32.partialorder %v78, %v382
    %vm415 = vcmp.ge.f32.partialorder %v79, %v383
    %vm416 = vcmp.ge.f32.partialorder %v80, %v384
    %vm417 = vcmp.ge.f32.partialorder %v81, %v385
    %vm418 = vcmp.ge.f32.partialorder %v82, %v386
    %vm419 = vcmp.ge.f32.partialorder %v83, %v387
    %vm420 = vcmp.ge.f32.partialorder %v84, %v388
    %vm421 = vcmp.ge.f32.partialorder %v85, %v389
    %vm422 = vcmp.ge.f32.partialorder %v86, %v390
    %vm423 = vcmp.ge.f32.partialorder %v87, %v391
    %vm424 = vcmp.ge.f32.partialorder %v88, %v392
    %vm425 = vcmp.ge.f32.partialorder %v89, %v393
    %v426 = vsel %vm410, 1, 0
    %v427 = vsel %vm411, 1, 0
    %v428 = vsel %vm412, 1, 0
    %v429 = vsel %vm413, 1, 0
    %v430 = vsel %vm414, 1, 0
    %v431 = vsel %vm415, 1, 0
    %v432 = vsel %vm416, 1, 0
    %v433 = vsel %vm417, 1, 0
    %v434 = vsel %vm418, 1, 0
    %v435 = vsel %vm419, 1, 0
    %v436 = vsel %vm420, 1, 0
    %v437 = vsel %vm421, 1, 0
    %v438 = vsel %vm422, 1, 0
    %v439 = vsel %vm423, 1, 0
    %v440 = vsel %vm424, 1, 0
    %v441 = vsel %vm425, 1, 0
    %v442 = vsub.s32 1, %v426
    %v443 = vsub.s32 1, %v427
    %v444 = vsub.s32 1, %v428
    %v445 = vsub.s32 1, %v429
    %v446 = vsub.s32 1, %v430
    %v447 = vsub.s32 1, %v431
    %v448 = vsub.s32 1, %v432
    %v449 = vsub.s32 1, %v433
    %v450 = vsub.s32 1, %v434
    %v451 = vsub.s32 1, %v435
    %v452 = vsub.s32 1, %v436
    %v453 = vsub.s32 1, %v437
    %v454 = vsub.s32 1, %v438
    %v455 = vsub.s32 1, %v439
    %v456 = vsub.s32 1, %v440
    %v457 = vsub.s32 1, %v441
    %v458 = vadd.s32 %v362, %v442
    %v459 = vadd.s32 %v363, %v443
    %v460 = vadd.s32 %v364, %v444
    %v461 = vadd.s32 %v365, %v445
    %v462 = vadd.s32 %v366, %v446
    %v463 = vadd.s32 %v367, %v447
    %v464 = vadd.s32 %v368, %v448
    %v465 = vadd.s32 %v369, %v449
    %v466 = vadd.s32 %v370, %v450
    %v467 = vadd.s32 %v371, %v451
    %v468 = vadd.s32 %v372, %v452
    %v469 = vadd.s32 %v373, %v453
    %v470 = vadd.s32 %v374, %v454
    %v471 = vadd.s32 %v375, %v455
    %v472 = vadd.s32 %v376, %v456
    %v473 = vadd.s32 %v377, %v457
    %v474 = vrot.slane %v74, 5
    %v475 = vrot.slane %v75, 5
    %v476 = vrot.slane %v76, 5
    %v477 = vrot.slane %v77, 5
    %v478 = vrot.slane %v78, 5
    %v479 = vrot.slane %v79, 5
    %v480 = vrot.slane %v80, 5
    %v481 = vrot.slane %v81, 5
    %v482 = vrot.slane %v82, 5
    %v483 = vrot.slane %v83, 5
    %v484 = vrot.slane %v84, 5
    %v485 = vrot.slane %v85, 5
    %v486 = vrot.slane %v86, 5
    %v487 = vrot.slane %v87, 5
    %v488 = vrot.slane %v88, 5
    %v489 = vrot.slane %v89, 5
    %vm506 = vcmp.ge.f32.partialorder %v74, %v474
    %vm507 = vcmp.ge.f32.partialorder %v75, %v475
    %vm508 = vcmp.ge.f32.partialorder %v76, %v476
    %vm509 = vcmp.ge.f32.partialorder %v77, %v477
    %vm510 = vcmp.ge.f32.partialorder %v78, %v478
    %vm511 = vcmp.ge.f32.partialorder %v79, %v479
    %vm512 = vcmp.ge.f32.partialorder %v80, %v480
    %vm513 = vcmp.ge.f32.partialorder %v81, %v481
    %vm514 = vcmp.ge.f32.partialorder %v82, %v482
    %vm515 = vcmp.ge.f32.partialorder %v83, %v483
    %vm516 = vcmp.ge.f32.partialorder %v84, %v484
    %vm517 = vcmp.ge.f32.partialorder %v85, %v485
    %vm518 = vcmp.ge.f32.partialorder %v86, %v486
    %vm519 = vcmp.ge.f32.partialorder %v87, %v487
    %vm520 = vcmp.ge.f32.partialorder %v88, %v488
    %vm521 = vcmp.ge.f32.partialorder %v89, %v489
    %v522 = vsel %vm506, 1, 0
    %v523 = vsel %vm507, 1, 0
    %v524 = vsel %vm508, 1, 0
    %v525 = vsel %vm509, 1, 0
    %v526 = vsel %vm510, 1, 0
    %v527 = vsel %vm511, 1, 0
    %v528 = vsel %vm512, 1, 0
    %v529 = vsel %vm513, 1, 0
    %v530 = vsel %vm514, 1, 0
    %v531 = vsel %vm515, 1, 0
    %v532 = vsel %vm516, 1, 0
    %v533 = vsel %vm517, 1, 0
    %v534 = vsel %vm518, 1, 0
    %v535 = vsel %vm519, 1, 0
    %v536 = vsel %vm520, 1, 0
    %v537 = vsel %vm521, 1, 0
    %v538 = vsub.s32 1, %v522
    %v539 = vsub.s32 1, %v523
    %v540 = vsub.s32 1, %v524
    %v541 = vsub.s32 1, %v525
    %v542 = vsub.s32 1, %v526
    %v543 = vsub.s32 1, %v527
    %v544 = vsub.s32 1, %v528
    %v545 = vsub.s32 1, %v529
    %v546 = vsub.s32 1, %v530
    %v547 = vsub.s32 1, %v531
    %v548 = vsub.s32 1, %v532
    %v549 = vsub.s32 1, %v533
    %v550 = vsub.s32 1, %v534
    %v551 = vsub.s32 1, %v535
    %v552 = vsub.s32 1, %v536
    %v553 = vsub.s32 1, %v537
    %v554 = vadd.s32 %v458, %v538
    %v555 = vadd.s32 %v459, %v539
    %v556 = vadd.s32 %v460, %v540
    %v557 = vadd.s32 %v461, %v541
    %v558 = vadd.s32 %v462, %v542
    %v559 = vadd.s32 %v463, %v543
    %v560 = vadd.s32 %v464, %v544
    %v561 = vadd.s32 %v465, %v545
    %v562 = vadd.s32 %v466, %v546
    %v563 = vadd.s32 %v467, %v547
    %v564 = vadd.s32 %v468, %v548
    %v565 = vadd.s32 %v469, %v549
    %v566 = vadd.s32 %v470, %v550
    %v567 = vadd.s32 %v471, %v551
    %v568 = vadd.s32 %v472, %v552
    %v569 = vadd.s32 %v473, %v553
    %v570 = vrot.slane %v74, 6
    %v571 = vrot.slane %v75, 6
    %v572 = vrot.slane %v76, 6
    %v573 = vrot.slane %v77, 6
    %v574 = vrot.slane %v78, 6
    %v575 = vrot.slane %v79, 6
    %v576 = vrot.slane %v80, 6
    %v577 = vrot.slane %v81, 6
    %v578 = vrot.slane %v82, 6
    %v579 = vrot.slane %v83, 6
    %v580 = vrot.slane %v84, 6
    %v581 = vrot.slane %v85, 6
    %v582 = vrot.slane %v86, 6
    %v583 = vrot.slane %v87, 6
    %v584 = vrot.slane %v88, 6
    %v585 = vrot.slane %v89, 6
    %vm602 = vcmp.ge.f32.partialorder %v74, %v570
    %vm603 = vcmp.ge.f32.partialorder %v75, %v571
    %vm604 = vcmp.ge.f32.partialorder %v76, %v572
    %vm605 = vcmp.ge.f32.partialorder %v77, %v573
    %vm606 = vcmp.ge.f32.partialorder %v78, %v574
    %vm607 = vcmp.ge.f32.partialorder %v79, %v575
    %vm608 = vcmp.ge.f32.partialorder %v80, %v576
    %vm609 = vcmp.ge.f32.partialorder %v81, %v577
    %vm610 = vcmp.ge.f32.partialorder %v82, %v578
    %vm611 = vcmp.ge.f32.partialorder %v83, %v579
    %vm612 = vcmp.ge.f32.partialorder %v84, %v580
    %vm613 = vcmp.ge.f32.partialorder %v85, %v581
    %vm614 = vcmp.ge.f32.partialorder %v86, %v582
    %vm615 = vcmp.ge.f32.partialorder %v87, %v583
    %vm616 = vcmp.ge.f32.partialorder %v88, %v584
    %vm617 = vcmp.ge.f32.partialorder %v89, %v585
    %v618 = vsel %vm602, 1, 0
    %v619 = vsel %vm603, 1, 0
    %v620 = vsel %vm604, 1, 0
    %v621 = vsel %vm605, 1, 0
    %v622 = vsel %vm606, 1, 0
    %v623 = vsel %vm607, 1, 0
    %v624 = vsel %vm608, 1, 0
    %v625 = vsel %vm609, 1, 0
    %v626 = vsel %vm610, 1, 0
    %v627 = vsel %vm611, 1, 0
    %v628 = vsel %vm612, 1, 0
    %v629 = vsel %vm613, 1, 0
    %v630 = vsel %vm614, 1, 0
    %v631 = vsel %vm615, 1, 0
    %v632 = vsel %vm616, 1, 0
    %v633 = vsel %vm617, 1, 0
    %v634 = vsub.s32 1, %v618
    %v635 = vsub.s32 1, %v619
    %v636 = vsub.s32 1, %v620
    %v637 = vsub.s32 1, %v621
    %v638 = vsub.s32 1, %v622
    %v639 = vsub.s32 1, %v623
    %v640 = vsub.s32 1, %v624
    %v641 = vsub.s32 1, %v625
    %v642 = vsub.s32 1, %v626
    %v643 = vsub.s32 1, %v627
    %v644 = vsub.s32 1, %v628
    %v645 = vsub.s32 1, %v629
    %v646 = vsub.s32 1, %v630
    %v647 = vsub.s32 1, %v631
    %v648 = vsub.s32 1, %v632
    %v649 = vsub.s32 1, %v633
    %v650 = vadd.s32 %v554, %v634
    %v651 = vadd.s32 %v555, %v635
    %v652 = vadd.s32 %v556, %v636
    %v653 = vadd.s32 %v557, %v637
    %v654 = vadd.s32 %v558, %v638
    %v655 = vadd.s32 %v559, %v639
    %v656 = vadd.s32 %v560, %v640
    %v657 = vadd.s32 %v561, %v641
    %v658 = vadd.s32 %v562, %v642
    %v659 = vadd.s32 %v563, %v643
    %v660 = vadd.s32 %v564, %v644
    %v661 = vadd.s32 %v565, %v645
    %v662 = vadd.s32 %v566, %v646
    %v663 = vadd.s32 %v567, %v647
    %v664 = vadd.s32 %v568, %v648
    %v665 = vadd.s32 %v569, %v649
    %v666 = vrot.slane %v74, 7
    %v667 = vrot.slane %v75, 7
    %v668 = vrot.slane %v76, 7
    %v669 = vrot.slane %v77, 7
    %v670 = vrot.slane %v78, 7
    %v671 = vrot.slane %v79, 7
    %v672 = vrot.slane %v80, 7
    %v673 = vrot.slane %v81, 7
    %v674 = vrot.slane %v82, 7
    %v675 = vrot.slane %v83, 7
    %v676 = vrot.slane %v84, 7
    %v677 = vrot.slane %v85, 7
    %v678 = vrot.slane %v86, 7
    %v679 = vrot.slane %v87, 7
    %v680 = vrot.slane %v88, 7
    %v681 = vrot.slane %v89, 7
    %vm698 = vcmp.ge.f32.partialorder %v74, %v666
    %vm699 = vcmp.ge.f32.partialorder %v75, %v667
    %vm700 = vcmp.ge.f32.partialorder %v76, %v668
    %vm701 = vcmp.ge.f32.partialorder %v77, %v669
    %vm702 = vcmp.ge.f32.partialorder %v78, %v670
    %vm703 = vcmp.ge.f32.partialorder %v79, %v671
    %vm704 = vcmp.ge.f32.partialorder %v80, %v672
    %vm705 = vcmp.ge.f32.partialorder %v81, %v673
    %vm706 = vcmp.ge.f32.partialorder %v82, %v674
    %vm707 = vcmp.ge.f32.partialorder %v83, %v675
    %vm708 = vcmp.ge.f32.partialorder %v84, %v676
    %vm709 = vcmp.ge.f32.partialorder %v85, %v677
    %vm710 = vcmp.ge.f32.partialorder %v86, %v678
    %vm711 = vcmp.ge.f32.partialorder %v87, %v679
    %vm712 = vcmp.ge.f32.partialorder %v88, %v680
    %vm713 = vcmp.ge.f32.partialorder %v89, %v681
    %v714 = vsel %vm698, 1, 0
    %v715 = vsel %vm699, 1, 0
    %v716 = vsel %vm700, 1, 0
    %v717 = vsel %vm701, 1, 0
    %v718 = vsel %vm702, 1, 0
    %v719 = vsel %vm703, 1, 0
    %v720 = vsel %vm704, 1, 0
    %v721 = vsel %vm705, 1, 0
    %v722 = vsel %vm706, 1, 0
    %v723 = vsel %vm707, 1, 0
    %v724 = vsel %vm708, 1, 0
    %v725 = vsel %vm709, 1, 0
    %v726 = vsel %vm710, 1, 0
    %v727 = vsel %vm711, 1, 0
    %v728 = vsel %vm712, 1, 0
    %v729 = vsel %vm713, 1, 0
    %v730 = vsub.s32 1, %v714
    %v731 = vsub.s32 1, %v715
    %v732 = vsub.s32 1, %v716
    %v733 = vsub.s32 1, %v717
    %v734 = vsub.s32 1, %v718
    %v735 = vsub.s32 1, %v719
    %v736 = vsub.s32 1, %v720
    %v737 = vsub.s32 1, %v721
    %v738 = vsub.s32 1, %v722
    %v739 = vsub.s32 1, %v723
    %v740 = vsub.s32 1, %v724
    %v741 = vsub.s32 1, %v725
    %v742 = vsub.s32 1, %v726
    %v743 = vsub.s32 1, %v727
    %v744 = vsub.s32 1, %v728
    %v745 = vsub.s32 1, %v729
    %v746 = vadd.s32 %v650, %v730
    %v747 = vadd.s32 %v651, %v731
    %v748 = vadd.s32 %v652, %v732
    %v749 = vadd.s32 %v653, %v733
    %v750 = vadd.s32 %v654, %v734
    %v751 = vadd.s32 %v655, %v735
    %v752 = vadd.s32 %v656, %v736
    %v753 = vadd.s32 %v657, %v737
    %v754 = vadd.s32 %v658, %v738
    %v755 = vadd.s32 %v659, %v739
    %v756 = vadd.s32 %v660, %v740
    %v757 = vadd.s32 %v661, %v741
    %v758 = vadd.s32 %v662, %v742
    %v759 = vadd.s32 %v663, %v743
    %v760 = vadd.s32 %v664, %v744
    %v761 = vadd.s32 %v665, %v745
    %v762 = vrot.slane %v154, 1
    %v763 = vrot.slane %v155, 1
    %v764 = vrot.slane %v156, 1
    %v765 = vrot.slane %v157, 1
    %v766 = vrot.slane %v158, 1
    %v767 = vrot.slane %v159, 1
    %v768 = vrot.slane %v160, 1
    %v769 = vrot.slane %v161, 1
    %v770 = vrot.slane %v162, 1
    %v771 = vrot.slane %v163, 1
    %v772 = vrot.slane %v164, 1
    %v773 = vrot.slane %v165, 1
    %v774 = vrot.slane %v166, 1
    %v775 = vrot.slane %v167, 1
    %v776 = vrot.slane %v168, 1
    %v777 = vrot.slane %v169, 1
    %v778 = vadd.s32 %v234, %v762
    %v779 = vadd.s32 %v235, %v763
    %v780 = vadd.s32 %v236, %v764
    %v781 = vadd.s32 %v237, %v765
    %v782 = vadd.s32 %v238, %v766
    %v783 = vadd.s32 %v239, %v767
    %v784 = vadd.s32 %v240, %v768
    %v785 = vadd.s32 %v241, %v769
    %v786 = vadd.s32 %v242, %v770
    %v787 = vadd.s32 %v243, %v771
    %v788 = vadd.s32 %v244, %v772
    %v789 = vadd.s32 %v245, %v773
    %v790 = vadd.s32 %v246, %v774
    %v791 = vadd.s32 %v247, %v775
    %v792 = vadd.s32 %v248, %v776
    %v793 = vadd.s32 %v249, %v777
    %v794 = vrot.slane %v170, 1
    %v795 = vrot.slane %v171, 1
    %v796 = vrot.slane %v172, 1
    %v797 = vrot.slane %v173, 1
    %v798 = vrot.slane %v174, 1
    %v799 = vrot.slane %v175, 1
    %v800 = vrot.slane %v176, 1
    %v801 = vrot.slane %v177, 1
    %v802 = vrot.slane %v178, 1
    %v803 = vrot.slane %v179, 1
    %v804 = vrot.slane %v180, 1
    %v805 = vrot.slane %v181, 1
    %v806 = vrot.slane %v182, 1
    %v807 = vrot.slane %v183, 1
    %v808 = vrot.slane %v184, 1
    %v809 = vrot.slane %v185, 1
    %v810 = vadd.s32 %v154, %v794
    %v811 = vadd.s32 %v155, %v795
    %v812 = vadd.s32 %v156, %v796
    %v813 = vadd.s32 %v157, %v797
    %v814 = vadd.s32 %v158, %v798
    %v815 = vadd.s32 %v159, %v799
    %v816 = vadd.s32 %v160, %v800
    %v817 = vadd.s32 %v161, %v801
    %v818 = vadd.s32 %v162, %v802
    %v819 = vadd.s32 %v163, %v803
    %v820 = vadd.s32 %v164, %v804
    %v821 = vadd.s32 %v165, %v805
    %v822 = vadd.s32 %v166, %v806
    %v823 = vadd.s32 %v167, %v807
    %v824 = vadd.s32 %v168, %v808
    %v825 = vadd.s32 %v169, %v809
    %v826 = vrot.slane %v234, 1
    %v827 = vrot.slane %v235, 1
    %v828 = vrot.slane %v236, 1
    %v829 = vrot.slane %v237, 1
    %v830 = vrot.slane %v238, 1
    %v831 = vrot.slane %v239, 1
    %v832 = vrot.slane %v240, 1
    %v833 = vrot.slane %v241, 1
    %v834 = vrot.slane %v242, 1
    %v835 = vrot.slane %v243, 1
    %v836 = vrot.slane %v244, 1
    %v837 = vrot.slane %v245, 1
    %v838 = vrot.slane %v246, 1
    %v839 = vrot.slane %v247, 1
    %v840 = vrot.slane %v248, 1
    %v841 = vrot.slane %v249, 1
    %v842 = vadd.s32 %v330, %v826
    %v843 = vadd.s32 %v331, %v827
    %v844 = vadd.s32 %v332, %v828
    %v845 = vadd.s32 %v333, %v829
    %v846 = vadd.s32 %v334, %v830
    %v847 = vadd.s32 %v335, %v831
    %v848 = vadd.s32 %v336, %v832
    %v849 = vadd.s32 %v337, %v833
    %v850 = vadd.s32 %v338, %v834
    %v851 = vadd.s32 %v339, %v835
    %v852 = vadd.s32 %v340, %v836
    %v853 = vadd.s32 %v341, %v837
    %v854 = vadd.s32 %v342, %v838
    %v855 = vadd.s32 %v343, %v839
    %v856 = vadd.s32 %v344, %v840
    %v857 = vadd.s32 %v345, %v841
    %v858 = vrot.slane %v250, 1
    %v859 = vrot.slane %v251, 1
    %v860 = vrot.slane %v252, 1
    %v861 = vrot.slane %v253, 1
    %v862 = vrot.slane %v254, 1
    %v863 = vrot.slane %v255, 1
    %v864 = vrot.slane %v256, 1
    %v865 = vrot.slane %v257, 1
    %v866 = vrot.slane %v258, 1
    %v867 = vrot.slane %v259, 1
    %v868 = vrot.slane %v260, 1
    %v869 = vrot.slane %v261, 1
    %v870 = vrot.slane %v262, 1
    %v871 = vrot.slane %v263, 1
    %v872 = vrot.slane %v264, 1
    %v873 = vrot.slane %v265, 1
    %v874 = vadd.s32 %v810, %v858
    %v875 = vadd.s32 %v811, %v859
    %v876 = vadd.s32 %v812, %v860
    %v877 = vadd.s32 %v813, %v861
    %v878 = vadd.s32 %v814, %v862
    %v879 = vadd.s32 %v815, %v863
    %v880 = vadd.s32 %v816, %v864
    %v881 = vadd.s32 %v817, %v865
    %v882 = vadd.s32 %v818, %v866
    %v883 = vadd.s32 %v819, %v867
    %v884 = vadd.s32 %v820, %v868
    %v885 = vadd.s32 %v821, %v869
    %v886 = vadd.s32 %v822, %v870
    %v887 = vadd.s32 %v823, %v871
    %v888 = vadd.s32 %v824, %v872
    %v889 = vadd.s32 %v825, %v873
    %v890 = vrot.slane %v330, 1
    %v891 = vrot.slane %v331, 1
    %v892 = vrot.slane %v332, 1
    %v893 = vrot.slane %v333, 1
    %v894 = vrot.slane %v334, 1
    %v895 = vrot.slane %v335, 1
    %v896 = vrot.slane %v336, 1
    %v897 = vrot.slane %v337, 1
    %v898 = vrot.slane %v338, 1
    %v899 = vrot.slane %v339, 1
    %v900 = vrot.slane %v340, 1
    %v901 = vrot.slane %v341, 1
    %v902 = vrot.slane %v342, 1
    %v903 = vrot.slane %v343, 1
    %v904 = vrot.slane %v344, 1
    %v905 = vrot.slane %v345, 1
    %v906 = vadd.s32 %v426, %v890
    %v907 = vadd.s32 %v427, %v891
    %v908 = vadd.s32 %v428, %v892
    %v909 = vadd.s32 %v429, %v893
    %v910 = vadd.s32 %v430, %v894
    %v911 = vadd.s32 %v431, %v895
    %v912 = vadd.s32 %v432, %v896
    %v913 = vadd.s32 %v433, %v897
    %v914 = vadd.s32 %v434, %v898
    %v915 = vadd.s32 %v435, %v899
    %v916 = vadd.s32 %v436, %v900
    %v917 = vadd.s32 %v437, %v901
    %v918 = vadd.s32 %v438, %v902
    %v919 = vadd.s32 %v439, %v903
    %v920 = vadd.s32 %v440, %v904
    %v921 = vadd.s32 %v441, %v905
    %v922 = vrot.slane %v346, 1
    %v923 = vrot.slane %v347, 1
    %v924 = vrot.slane %v348, 1
    %v925 = vrot.slane %v349, 1
    %v926 = vrot.slane %v350, 1
    %v927 = vrot.slane %v351, 1
    %v928 = vrot.slane %v352, 1
    %v929 = vrot.slane %v353, 1
    %v930 = vrot.slane %v354, 1
    %v931 = vrot.slane %v355, 1
    %v932 = vrot.slane %v356, 1
    %v933 = vrot.slane %v357, 1
    %v934 = vrot.slane %v358, 1
    %v935 = vrot.slane %v359, 1
    %v936 = vrot.slane %v360, 1
    %v937 = vrot.slane %v361, 1
    %v938 = vadd.s32 %v874, %v922
    %v939 = vadd.s32 %v875, %v923
    %v940 = vadd.s32 %v876, %v924
    %v941 = vadd.s32 %v877, %v925
    %v942 = vadd.s32 %v878, %v926
    %v943 = vadd.s32 %v879, %v927
    %v944 = vadd.s32 %v880, %v928
    %v945 = vadd.s32 %v881, %v929
    %v946 = vadd.s32 %v882, %v930
    %v947 = vadd.s32 %v883, %v931
    %v948 = vadd.s32 %v884, %v932
    %v949 = vadd.s32 %v885, %v933
    %v950 = vadd.s32 %v886, %v934
    %v951 = vadd.s32 %v887, %v935
    %v952 = vadd.s32 %v888, %v936
    %v953 = vadd.s32 %v889, %v937
    %v954 = vrot.slane %v426, 1
    %v955 = vrot.slane %v427, 1
    %v956 = vrot.slane %v428, 1
    %v957 = vrot.slane %v429, 1
    %v958 = vrot.slane %v430, 1
    %v959 = vrot.slane %v431, 1
    %v960 = vrot.slane %v432, 1
    %v961 = vrot.slane %v433, 1
    %v962 = vrot.slane %v434, 1
    %v963 = vrot.slane %v435, 1
    %v964 = vrot.slane %v436, 1
    %v965 = vrot.slane %v437, 1
    %v966 = vrot.slane %v438, 1
    %v967 = vrot.slane %v439, 1
    %v968 = vrot.slane %v440, 1
    %v969 = vrot.slane %v441, 1
    %v970 = vadd.s32 %v522, %v954
    %v971 = vadd.s32 %v523, %v955
    %v972 = vadd.s32 %v524, %v956
    %v973 = vadd.s32 %v525, %v957
    %v974 = vadd.s32 %v526, %v958
    %v975 = vadd.s32 %v527, %v959
    %v976 = vadd.s32 %v528, %v960
    %v977 = vadd.s32 %v529, %v961
    %v978 = vadd.s32 %v530, %v962
    %v979 = vadd.s32 %v531, %v963
    %v980 = vadd.s32 %v532, %v964
    %v981 = vadd.s32 %v533, %v965
    %v982 = vadd.s32 %v534, %v966
    %v983 = vadd.s32 %v535, %v967
    %v984 = vadd.s32 %v536, %v968
    %v985 = vadd.s32 %v537, %v969
    %v986 = vrot.slane %v442, 1
    %v987 = vrot.slane %v443, 1
    %v988 = vrot.slane %v444, 1
    %v989 = vrot.slane %v445, 1
    %v990 = vrot.slane %v446, 1
    %v991 = vrot.slane %v447, 1
    %v992 = vrot.slane %v448, 1
    %v993 = vrot.slane %v449, 1
    %v994 = vrot.slane %v450, 1
    %v995 = vrot.slane %v451, 1
    %v996 = vrot.slane %v452, 1
    %v997 = vrot.slane %v453, 1
    %v998 = vrot.slane %v454, 1
    %v999 = vrot.slane %v455, 1
    %v1000 = vrot.slane %v456, 1
    %v1001 = vrot.slane %v457, 1
    %v1002 = vadd.s32 %v938, %v986
    %v1003 = vadd.s32 %v939, %v987
    %v1004 = vadd.s32 %v940, %v988
    %v1005 = vadd.s32 %v941, %v989
    %v1006 = vadd.s32 %v942, %v990
    %v1007 = vadd.s32 %v943, %v991
    %v1008 = vadd.s32 %v944, %v992
    %v1009 = vadd.s32 %v945, %v993
    %v1010 = vadd.s32 %v946, %v994
    %v1011 = vadd.s32 %v947, %v995
    %v1012 = vadd.s32 %v948, %v996
    %v1013 = vadd.s32 %v949, %v997
    %v1014 = vadd.s32 %v950, %v998
    %v1015 = vadd.s32 %v951, %v999
    %v1016 = vadd.s32 %v952, %v1000
    %v1017 = vadd.s32 %v953, %v1001
    %v1018 = vrot.slane %v522, 1
    %v1019 = vrot.slane %v523, 1
    %v1020 = vrot.slane %v524, 1
    %v1021 = vrot.slane %v525, 1
    %v1022 = vrot.slane %v526, 1
    %v1023 = vrot.slane %v527, 1
    %v1024 = vrot.slane %v528, 1
    %v1025 = vrot.slane %v529, 1
    %v1026 = vrot.slane %v530, 1
    %v1027 = vrot.slane %v531, 1
    %v1028 = vrot.slane %v532, 1
    %v1029 = vrot.slane %v533, 1
    %v1030 = vrot.slane %v534, 1
    %v1031 = vrot.slane %v535, 1
    %v1032 = vrot.slane %v536, 1
    %v1033 = vrot.slane %v537, 1
    %v1034 = vadd.s32 %v618, %v1018
    %v1035 = vadd.s32 %v619, %v1019
    %v1036 = vadd.s32 %v620, %v1020
    %v1037 = vadd.s32 %v621, %v1021
    %v1038 = vadd.s32 %v622, %v1022
    %v1039 = vadd.s32 %v623, %v1023
    %v1040 = vadd.s32 %v624, %v1024
    %v1041 = vadd.s32 %v625, %v1025
    %v1042 = vadd.s32 %v626, %v1026
    %v1043 = vadd.s32 %v627, %v1027
    %v1044 = vadd.s32 %v628, %v1028
    %v1045 = vadd.s32 %v629, %v1029
    %v1046 = vadd.s32 %v630, %v1030
    %v1047 = vadd.s32 %v631, %v1031
    %v1048 = vadd.s32 %v632, %v1032
    %v1049 = vadd.s32 %v633, %v1033
    %v1050 = vrot.slane %v538, 1
    %v1051 = vrot.slane %v539, 1
    %v1052 = vrot.slane %v540, 1
    %v1053 = vrot.slane %v541, 1
    %v1054 = vrot.slane %v542, 1
    %v1055 = vrot.slane %v543, 1
    %v1056 = vrot.slane %v544, 1
    %v1057 = vrot.slane %v545, 1
    %v1058 = vrot.slane %v546, 1
    %v1059 = vrot.slane %v547, 1
    %v1060 = vrot.slane %v548, 1
    %v1061 = vrot.slane %v549, 1
    %v1062 = vrot.slane %v550, 1
    %v1063 = vrot.slane %v551, 1
    %v1064 = vrot.slane %v552, 1
    %v1065 = vrot.slane %v553, 1
    %v1066 = vadd.s32 %v1002, %v1050
    %v1067 = vadd.s32 %v1003, %v1051
    %v1068 = vadd.s32 %v1004, %v1052
    %v1069 = vadd.s32 %v1005, %v1053
    %v1070 = vadd.s32 %v1006, %v1054
    %v1071 = vadd.s32 %v1007, %v1055
    %v1072 = vadd.s32 %v1008, %v1056
    %v1073 = vadd.s32 %v1009, %v1057
    %v1074 = vadd.s32 %v1010, %v1058
    %v1075 = vadd.s32 %v1011, %v1059
    %v1076 = vadd.s32 %v1012, %v1060
    %v1077 = vadd.s32 %v1013, %v1061
    %v1078 = vadd.s32 %v1014, %v1062
    %v1079 = vadd.s32 %v1015, %v1063
    %v1080 = vadd.s32 %v1016, %v1064
    %v1081 = vadd.s32 %v1017, %v1065
    %v1082 = vrot.slane %v618, 1
    %v1083 = vrot.slane %v619, 1
    %v1084 = vrot.slane %v620, 1
    %v1085 = vrot.slane %v621, 1
    %v1086 = vrot.slane %v622, 1
    %v1087 = vrot.slane %v623, 1
    %v1088 = vrot.slane %v624, 1
    %v1089 = vrot.slane %v625, 1
    %v1090 = vrot.slane %v626, 1
    %v1091 = vrot.slane %v627, 1
    %v1092 = vrot.slane %v628, 1
    %v1093 = vrot.slane %v629, 1
    %v1094 = vrot.slane %v630, 1
    %v1095 = vrot.slane %v631, 1
    %v1096 = vrot.slane %v632, 1
    %v1097 = vrot.slane %v633, 1
    %v1098 = vadd.s32 %v714, %v1082
    %v1099 = vadd.s32 %v715, %v1083
    %v1100 = vadd.s32 %v716, %v1084
    %v1101 = vadd.s32 %v717, %v1085
    %v1102 = vadd.s32 %v718, %v1086
    %v1103 = vadd.s32 %v719, %v1087
    %v1104 = vadd.s32 %v720, %v1088
    %v1105 = vadd.s32 %v721, %v1089
    %v1106 = vadd.s32 %v722, %v1090
    %v1107 = vadd.s32 %v723, %v1091
    %v1108 = vadd.s32 %v724, %v1092
    %v1109 = vadd.s32 %v725, %v1093
    %v1110 = vadd.s32 %v726, %v1094
    %v1111 = vadd.s32 %v727, %v1095
    %v1112 = vadd.s32 %v728, %v1096
    %v1113 = vadd.s32 %v729, %v1097
    %v1114 = vrot.slane %v634, 1
    %v1115 = vrot.slane %v635, 1
    %v1116 = vrot.slane %v636, 1
    %v1117 = vrot.slane %v637, 1
    %v1118 = vrot.slane %v638, 1
    %v1119 = vrot.slane %v639, 1
    %v1120 = vrot.slane %v640, 1
    %v1121 = vrot.slane %v641, 1
    %v1122 = vrot.slane %v642, 1
    %v1123 = vrot.slane %v643, 1
    %v1124 = vrot.slane %v644, 1
    %v1125 = vrot.slane %v645, 1
    %v1126 = vrot.slane %v646, 1
    %v1127 = vrot.slane %v647, 1
    %v1128 = vrot.slane %v648, 1
    %v1129 = vrot.slane %v649, 1
    %v1130 = vadd.s32 %v1066, %v1114
    %v1131 = vadd.s32 %v1067, %v1115
    %v1132 = vadd.s32 %v1068, %v1116
    %v1133 = vadd.s32 %v1069, %v1117
    %v1134 = vadd.s32 %v1070, %v1118
    %v1135 = vadd.s32 %v1071, %v1119
    %v1136 = vadd.s32 %v1072, %v1120
    %v1137 = vadd.s32 %v1073, %v1121
    %v1138 = vadd.s32 %v1074, %v1122
    %v1139 = vadd.s32 %v1075, %v1123
    %v1140 = vadd.s32 %v1076, %v1124
    %v1141 = vadd.s32 %v1077, %v1125
    %v1142 = vadd.s32 %v1078, %v1126
    %v1143 = vadd.s32 %v1079, %v1127
    %v1144 = vadd.s32 %v1080, %v1128
    %v1145 = vadd.s32 %v1081, %v1129
    %v1146 = vrot.slane %v154, 2
    %v1147 = vrot.slane %v155, 2
    %v1148 = vrot.slane %v156, 2
    %v1149 = vrot.slane %v157, 2
    %v1150 = vrot.slane %v158, 2
    %v1151 = vrot.slane %v159, 2
    %v1152 = vrot.slane %v160, 2
    %v1153 = vrot.slane %v161, 2
    %v1154 = vrot.slane %v162, 2
    %v1155 = vrot.slane %v163, 2
    %v1156 = vrot.slane %v164, 2
    %v1157 = vrot.slane %v165, 2
    %v1158 = vrot.slane %v166, 2
    %v1159 = vrot.slane %v167, 2
    %v1160 = vrot.slane %v168, 2
    %v1161 = vrot.slane %v169, 2
    %v1162 = vadd.s32 %v842, %v1146
    %v1163 = vadd.s32 %v843, %v1147
    %v1164 = vadd.s32 %v844, %v1148
    %v1165 = vadd.s32 %v845, %v1149
    %v1166 = vadd.s32 %v846, %v1150
    %v1167 = vadd.s32 %v847, %v1151
    %v1168 = vadd.s32 %v848, %v1152
    %v1169 = vadd.s32 %v849, %v1153
    %v1170 = vadd.s32 %v850, %v1154
    %v1171 = vadd.s32 %v851, %v1155
    %v1172 = vadd.s32 %v852, %v1156
    %v1173 = vadd.s32 %v853, %v1157
    %v1174 = vadd.s32 %v854, %v1158
    %v1175 = vadd.s32 %v855, %v1159
    %v1176 = vadd.s32 %v856, %v1160
    %v1177 = vadd.s32 %v857, %v1161
    %v1178 = vrot.slane %v170, 2
    %v1179 = vrot.slane %v171, 2
    %v1180 = vrot.slane %v172, 2
    %v1181 = vrot.slane %v173, 2
    %v1182 = vrot.slane %v174, 2
    %v1183 = vrot.slane %v175, 2
    %v1184 = vrot.slane %v176, 2
    %v1185 = vrot.slane %v177, 2
    %v1186 = vrot.slane %v178, 2
    %v1187 = vrot.slane %v179, 2
    %v1188 = vrot.slane %v180, 2
    %v1189 = vrot.slane %v181, 2
    %v1190 = vrot.slane %v182, 2
    %v1191 = vrot.slane %v183, 2
    %v1192 = vrot.slane %v184, 2
    %v1193 = vrot.slane %v185, 2
    %v1194 = vadd.s32 %v778, %v1178
    %v1195 = vadd.s32 %v779, %v1179
    %v1196 = vadd.s32 %v780, %v1180
    %v1197 = vadd.s32 %v781, %v1181
    %v1198 = vadd.s32 %v782, %v1182
    %v1199 = vadd.s32 %v783, %v1183
    %v1200 = vadd.s32 %v784, %v1184
    %v1201 = vadd.s32 %v785, %v1185
    %v1202 = vadd.s32 %v786, %v1186
    %v1203 = vadd.s32 %v787, %v1187
    %v1204 = vadd.s32 %v788, %v1188
    %v1205 = vadd.s32 %v789, %v1189
    %v1206 = vadd.s32 %v790, %v1190
    %v1207 = vadd.s32 %v791, %v1191
    %v1208 = vadd.s32 %v792, %v1192
    %v1209 = vadd.s32 %v793, %v1193
    %v1210 = vrot.slane %v234, 2
    %v1211 = vrot.slane %v235, 2
    %v1212 = vrot.slane %v236, 2
    %v1213 = vrot.slane %v237, 2
    %v1214 = vrot.slane %v238, 2
    %v1215 = vrot.slane %v239, 2
    %v1216 = vrot.slane %v240, 2
    %v1217 = vrot.slane %v241, 2
    %v1218 = vrot.slane %v242, 2
    %v1219 = vrot.slane %v243, 2
    %v1220 = vrot.slane %v244, 2
    %v1221 = vrot.slane %v245, 2
    %v1222 = vrot.slane %v246, 2
    %v1223 = vrot.slane %v247, 2
    %v1224 = vrot.slane %v248, 2
    %v1225 = vrot.slane %v249, 2
    %v1226 = vadd.s32 %v906, %v1210
    %v1227 = vadd.s32 %v907, %v1211
    %v1228 = vadd.s32 %v908, %v1212
    %v1229 = vadd.s32 %v909, %v1213
    %v1230 = vadd.s32 %v910, %v1214
    %v1231 = vadd.s32 %v911, %v1215
    %v1232 = vadd.s32 %v912, %v1216
    %v1233 = vadd.s32 %v913, %v1217
    %v1234 = vadd.s32 %v914, %v1218
    %v1235 = vadd.s32 %v915, %v1219
    %v1236 = vadd.s32 %v916, %v1220
    %v1237 = vadd.s32 %v917, %v1221
    %v1238 = vadd.s32 %v918, %v1222
    %v1239 = vadd.s32 %v919, %v1223
    %v1240 = vadd.s32 %v920, %v1224
    %v1241 = vadd.s32 %v921, %v1225
    %v1242 = vrot.slane %v250, 2
    %v1243 = vrot.slane %v251, 2
    %v1244 = vrot.slane %v252, 2
    %v1245 = vrot.slane %v253, 2
    %v1246 = vrot.slane %v254, 2
    %v1247 = vrot.slane %v255, 2
    %v1248 = vrot.slane %v256, 2
    %v1249 = vrot.slane %v257, 2
    %v1250 = vrot.slane %v258, 2
    %v1251 = vrot.slane %v259, 2
    %v1252 = vrot.slane %v260, 2
    %v1253 = vrot.slane %v261, 2
    %v1254 = vrot.slane %v262, 2
    %v1255 = vrot.slane %v263, 2
    %v1256 = vrot.slane %v264, 2
    %v1257 = vrot.slane %v265, 2
    %v1258 = vadd.s32 %v1194, %v1242
    %v1259 = vadd.s32 %v1195, %v1243
    %v1260 = vadd.s32 %v1196, %v1244
    %v1261 = vadd.s32 %v1197, %v1245
    %v1262 = vadd.s32 %v1198, %v1246
    %v1263 = vadd.s32 %v1199, %v1247
    %v1264 = vadd.s32 %v1200, %v1248
    %v1265 = vadd.s32 %v1201, %v1249
    %v1266 = vadd.s32 %v1202, %v1250
    %v1267 = vadd.s32 %v1203, %v1251
    %v1268 = vadd.s32 %v1204, %v1252
    %v1269 = vadd.s32 %v1205, %v1253
    %v1270 = vadd.s32 %v1206, %v1254
    %v1271 = vadd.s32 %v1207, %v1255
    %v1272 = vadd.s32 %v1208, %v1256
    %v1273 = vadd.s32 %v1209, %v1257
    %v1274 = vrot.slane %v330, 2
    %v1275 = vrot.slane %v331, 2
    %v1276 = vrot.slane %v332, 2
    %v1277 = vrot.slane %v333, 2
    %v1278 = vrot.slane %v334, 2
    %v1279 = vrot.slane %v335, 2
    %v1280 = vrot.slane %v336, 2
    %v1281 = vrot.slane %v337, 2
    %v1282 = vrot.slane %v338, 2
    %v1283 = vrot.slane %v339, 2
    %v1284 = vrot.slane %v340, 2
    %v1285 = vrot.slane %v341, 2
    %v1286 = vrot.slane %v342, 2
    %v1287 = vrot.slane %v343, 2
    %v1288 = vrot.slane %v344, 2
    %v1289 = vrot.slane %v345, 2
    %v1290 = vadd.s32 %v970, %v1274
    %v1291 = vadd.s32 %v971, %v1275
    %v1292 = vadd.s32 %v972, %v1276
    %v1293 = vadd.s32 %v973, %v1277
    %v1294 = vadd.s32 %v974, %v1278
    %v1295 = vadd.s32 %v975, %v1279
    %v1296 = vadd.s32 %v976, %v1280
    %v1297 = vadd.s32 %v977, %v1281
    %v1298 = vadd.s32 %v978, %v1282
    %v1299 = vadd.s32 %v979, %v1283
    %v1300 = vadd.s32 %v980, %v1284
    %v1301 = vadd.s32 %v981, %v1285
    %v1302 = vadd.s32 %v982, %v1286
    %v1303 = vadd.s32 %v983, %v1287
    %v1304 = vadd.s32 %v984, %v1288
    %v1305 = vadd.s32 %v985, %v1289
    %v1306 = vrot.slane %v346, 2
    %v1307 = vrot.slane %v347, 2
    %v1308 = vrot.slane %v348, 2
    %v1309 = vrot.slane %v349, 2
    %v1310 = vrot.slane %v350, 2
    %v1311 = vrot.slane %v351, 2
    %v1312 = vrot.slane %v352, 2
    %v1313 = vrot.slane %v353, 2
    %v1314 = vrot.slane %v354, 2
    %v1315 = vrot.slane %v355, 2
    %v1316 = vrot.slane %v356, 2
    %v1317 = vrot.slane %v357, 2
    %v1318 = vrot.slane %v358, 2
    %v1319 = vrot.slane %v359, 2
    %v1320 = vrot.slane %v360, 2
    %v1321 = vrot.slane %v361, 2
    %v1322 = vadd.s32 %v1258, %v1306
    %v1323 = vadd.s32 %v1259, %v1307
    %v1324 = vadd.s32 %v1260, %v1308
    %v1325 = vadd.s32 %v1261, %v1309
    %v1326 = vadd.s32 %v1262, %v1310
    %v1327 = vadd.s32 %v1263, %v1311
    %v1328 = vadd.s32 %v1264, %v1312
    %v1329 = vadd.s32 %v1265, %v1313
    %v1330 = vadd.s32 %v1266, %v1314
    %v1331 = vadd.s32 %v1267, %v1315
    %v1332 = vadd.s32 %v1268, %v1316
    %v1333 = vadd.s32 %v1269, %v1317
    %v1334 = vadd.s32 %v1270, %v1318
    %v1335 = vadd.s32 %v1271, %v1319
    %v1336 = vadd.s32 %v1272, %v1320
    %v1337 = vadd.s32 %v1273, %v1321
    %v1338 = vrot.slane %v426, 2
    %v1339 = vrot.slane %v427, 2
    %v1340 = vrot.slane %v428, 2
    %v1341 = vrot.slane %v429, 2
    %v1342 = vrot.slane %v430, 2
    %v1343 = vrot.slane %v431, 2
    %v1344 = vrot.slane %v432, 2
    %v1345 = vrot.slane %v433, 2
    %v1346 = vrot.slane %v434, 2
    %v1347 = vrot.slane %v435, 2
    %v1348 = vrot.slane %v436, 2
    %v1349 = vrot.slane %v437, 2
    %v1350 = vrot.slane %v438, 2
    %v1351 = vrot.slane %v439, 2
    %v1352 = vrot.slane %v440, 2
    %v1353 = vrot.slane %v441, 2
    %v1354 = vadd.s32 %v1034, %v1338
    %v1355 = vadd.s32 %v1035, %v1339
    %v1356 = vadd.s32 %v1036, %v1340
    %v1357 = vadd.s32 %v1037, %v1341
    %v1358 = vadd.s32 %v1038, %v1342
    %v1359 = vadd.s32 %v1039, %v1343
    %v1360 = vadd.s32 %v1040, %v1344
    %v1361 = vadd.s32 %v1041, %v1345
    %v1362 = vadd.s32 %v1042, %v1346
    %v1363 = vadd.s32 %v1043, %v1347
    %v1364 = vadd.s32 %v1044, %v1348
    %v1365 = vadd.s32 %v1045, %v1349
    %v1366 = vadd.s32 %v1046, %v1350
    %v1367 = vadd.s32 %v1047, %v1351
    %v1368 = vadd.s32 %v1048, %v1352
    %v1369 = vadd.s32 %v1049, %v1353
    %v1370 = vrot.slane %v442, 2
    %v1371 = vrot.slane %v443, 2
    %v1372 = vrot.slane %v444, 2
    %v1373 = vrot.slane %v445, 2
    %v1374 = vrot.slane %v446, 2
    %v1375 = vrot.slane %v447, 2
    %v1376 = vrot.slane %v448, 2
    %v1377 = vrot.slane %v449, 2
    %v1378 = vrot.slane %v450, 2
    %v1379 = vrot.slane %v451, 2
    %v1380 = vrot.slane %v452, 2
    %v1381 = vrot.slane %v453, 2
    %v1382 = vrot.slane %v454, 2
    %v1383 = vrot.slane %v455, 2
    %v1384 = vrot.slane %v456, 2
    %v1385 = vrot.slane %v457, 2
    %v1386 = vadd.s32 %v1322, %v1370
    %v1387 = vadd.s32 %v1323, %v1371
    %v1388 = vadd.s32 %v1324, %v1372
    %v1389 = vadd.s32 %v1325, %v1373
    %v1390 = vadd.s32 %v1326, %v1374
    %v1391 = vadd.s32 %v1327, %v1375
    %v1392 = vadd.s32 %v1328, %v1376
    %v1393 = vadd.s32 %v1329, %v1377
    %v1394 = vadd.s32 %v1330, %v1378
    %v1395 = vadd.s32 %v1331, %v1379
    %v1396 = vadd.s32 %v1332, %v1380
    %v1397 = vadd.s32 %v1333, %v1381
    %v1398 = vadd.s32 %v1334, %v1382
    %v1399 = vadd.s32 %v1335, %v1383
    %v1400 = vadd.s32 %v1336, %v1384
    %v1401 = vadd.s32 %v1337, %v1385
    %v1402 = vrot.slane %v522, 2
    %v1403 = vrot.slane %v523, 2
    %v1404 = vrot.slane %v524, 2
    %v1405 = vrot.slane %v525, 2
    %v1406 = vrot.slane %v526, 2
    %v1407 = vrot.slane %v527, 2
    %v1408 = vrot.slane %v528, 2
    %v1409 = vrot.slane %v529, 2
    %v1410 = vrot.slane %v530, 2
    %v1411 = vrot.slane %v531, 2
    %v1412 = vrot.slane %v532, 2
    %v1413 = vrot.slane %v533, 2
    %v1414 = vrot.slane %v534, 2
    %v1415 = vrot.slane %v535, 2
    %v1416 = vrot.slane %v536, 2
    %v1417 = vrot.slane %v537, 2
    %v1418 = vadd.s32 %v1098, %v1402
    %v1419 = vadd.s32 %v1099, %v1403
    %v1420 = vadd.s32 %v1100, %v1404
    %v1421 = vadd.s32 %v1101, %v1405
    %v1422 = vadd.s32 %v1102, %v1406
    %v1423 = vadd.s32 %v1103, %v1407
    %v1424 = vadd.s32 %v1104, %v1408
    %v1425 = vadd.s32 %v1105, %v1409
    %v1426 = vadd.s32 %v1106, %v1410
    %v1427 = vadd.s32 %v1107, %v1411
    %v1428 = vadd.s32 %v1108, %v1412
    %v1429 = vadd.s32 %v1109, %v1413
    %v1430 = vadd.s32 %v1110, %v1414
    %v1431 = vadd.s32 %v1111, %v1415
    %v1432 = vadd.s32 %v1112, %v1416
    %v1433 = vadd.s32 %v1113, %v1417
    %v1434 = vrot.slane %v538, 2
    %v1435 = vrot.slane %v539, 2
    %v1436 = vrot.slane %v540, 2
    %v1437 = vrot.slane %v541, 2
    %v1438 = vrot.slane %v542, 2
    %v1439 = vrot.slane %v543, 2
    %v1440 = vrot.slane %v544, 2
    %v1441 = vrot.slane %v545, 2
    %v1442 = vrot.slane %v546, 2
    %v1443 = vrot.slane %v547, 2
    %v1444 = vrot.slane %v548, 2
    %v1445 = vrot.slane %v549, 2
    %v1446 = vrot.slane %v550, 2
    %v1447 = vrot.slane %v551, 2
    %v1448 = vrot.slane %v552, 2
    %v1449 = vrot.slane %v553, 2
    %v1450 = vadd.s32 %v1386, %v1434
    %v1451 = vadd.s32 %v1387, %v1435
    %v1452 = vadd.s32 %v1388, %v1436
    %v1453 = vadd.s32 %v1389, %v1437
    %v1454 = vadd.s32 %v1390, %v1438
    %v1455 = vadd.s32 %v1391, %v1439
    %v1456 = vadd.s32 %v1392, %v1440
    %v1457 = vadd.s32 %v1393, %v1441
    %v1458 = vadd.s32 %v1394, %v1442
    %v1459 = vadd.s32 %v1395, %v1443
    %v1460 = vadd.s32 %v1396, %v1444
    %v1461 = vadd.s32 %v1397, %v1445
    %v1462 = vadd.s32 %v1398, %v1446
    %v1463 = vadd.s32 %v1399, %v1447
    %v1464 = vadd.s32 %v1400, %v1448
    %v1465 = vadd.s32 %v1401, %v1449
    %v1466 = vrot.slane %v154, 3
    %v1467 = vrot.slane %v155, 3
    %v1468 = vrot.slane %v156, 3
    %v1469 = vrot.slane %v157, 3
    %v1470 = vrot.slane %v158, 3
    %v1471 = vrot.slane %v159, 3
    %v1472 = vrot.slane %v160, 3
    %v1473 = vrot.slane %v161, 3
    %v1474 = vrot.slane %v162, 3
    %v1475 = vrot.slane %v163, 3
    %v1476 = vrot.slane %v164, 3
    %v1477 = vrot.slane %v165, 3
    %v1478 = vrot.slane %v166, 3
    %v1479 = vrot.slane %v167, 3
    %v1480 = vrot.slane %v168, 3
    %v1481 = vrot.slane %v169, 3
    %v1482 = vadd.s32 %v1226, %v1466
    %v1483 = vadd.s32 %v1227, %v1467
    %v1484 = vadd.s32 %v1228, %v1468
    %v1485 = vadd.s32 %v1229, %v1469
    %v1486 = vadd.s32 %v1230, %v1470
    %v1487 = vadd.s32 %v1231, %v1471
    %v1488 = vadd.s32 %v1232, %v1472
    %v1489 = vadd.s32 %v1233, %v1473
    %v1490 = vadd.s32 %v1234, %v1474
    %v1491 = vadd.s32 %v1235, %v1475
    %v1492 = vadd.s32 %v1236, %v1476
    %v1493 = vadd.s32 %v1237, %v1477
    %v1494 = vadd.s32 %v1238, %v1478
    %v1495 = vadd.s32 %v1239, %v1479
    %v1496 = vadd.s32 %v1240, %v1480
    %v1497 = vadd.s32 %v1241, %v1481
    %v1498 = vrot.slane %v170, 3
    %v1499 = vrot.slane %v171, 3
    %v1500 = vrot.slane %v172, 3
    %v1501 = vrot.slane %v173, 3
    %v1502 = vrot.slane %v174, 3
    %v1503 = vrot.slane %v175, 3
    %v1504 = vrot.slane %v176, 3
    %v1505 = vrot.slane %v177, 3
    %v1506 = vrot.slane %v178, 3
    %v1507 = vrot.slane %v179, 3
    %v1508 = vrot.slane %v180, 3
    %v1509 = vrot.slane %v181, 3
    %v1510 = vrot.slane %v182, 3
    %v1511 = vrot.slane %v183, 3
    %v1512 = vrot.slane %v184, 3
    %v1513 = vrot.slane %v185, 3
    %v1514 = vadd.s32 %v1162, %v1498
    %v1515 = vadd.s32 %v1163, %v1499
    %v1516 = vadd.s32 %v1164, %v1500
    %v1517 = vadd.s32 %v1165, %v1501
    %v1518 = vadd.s32 %v1166, %v1502
    %v1519 = vadd.s32 %v1167, %v1503
    %v1520 = vadd.s32 %v1168, %v1504
    %v1521 = vadd.s32 %v1169, %v1505
    %v1522 = vadd.s32 %v1170, %v1506
    %v1523 = vadd.s32 %v1171, %v1507
    %v1524 = vadd.s32 %v1172, %v1508
    %v1525 = vadd.s32 %v1173, %v1509
    %v1526 = vadd.s32 %v1174, %v1510
    %v1527 = vadd.s32 %v1175, %v1511
    %v1528 = vadd.s32 %v1176, %v1512
    %v1529 = vadd.s32 %v1177, %v1513
    %v1530 = vrot.slane %v234, 3
    %v1531 = vrot.slane %v235, 3
    %v1532 = vrot.slane %v236, 3
    %v1533 = vrot.slane %v237, 3
    %v1534 = vrot.slane %v238, 3
    %v1535 = vrot.slane %v239, 3
    %v1536 = vrot.slane %v240, 3
    %v1537 = vrot.slane %v241, 3
    %v1538 = vrot.slane %v242, 3
    %v1539 = vrot.slane %v243, 3
    %v1540 = vrot.slane %v244, 3
    %v1541 = vrot.slane %v245, 3
    %v1542 = vrot.slane %v246, 3
    %v1543 = vrot.slane %v247, 3
    %v1544 = vrot.slane %v248, 3
    %v1545 = vrot.slane %v249, 3
    %v1546 = vadd.s32 %v1290, %v1530
    %v1547 = vadd.s32 %v1291, %v1531
    %v1548 = vadd.s32 %v1292, %v1532
    %v1549 = vadd.s32 %v1293, %v1533
    %v1550 = vadd.s32 %v1294, %v1534
    %v1551 = vadd.s32 %v1295, %v1535
    %v1552 = vadd.s32 %v1296, %v1536
    %v1553 = vadd.s32 %v1297, %v1537
    %v1554 = vadd.s32 %v1298, %v1538
    %v1555 = vadd.s32 %v1299, %v1539
    %v1556 = vadd.s32 %v1300, %v1540
    %v1557 = vadd.s32 %v1301, %v1541
    %v1558 = vadd.s32 %v1302, %v1542
    %v1559 = vadd.s32 %v1303, %v1543
    %v1560 = vadd.s32 %v1304, %v1544
    %v1561 = vadd.s32 %v1305, %v1545
    %v1562 = vrot.slane %v250, 3
    %v1563 = vrot.slane %v251, 3
    %v1564 = vrot.slane %v252, 3
    %v1565 = vrot.slane %v253, 3
    %v1566 = vrot.slane %v254, 3
    %v1567 = vrot.slane %v255, 3
    %v1568 = vrot.slane %v256, 3
    %v1569 = vrot.slane %v257, 3
    %v1570 = vrot.slane %v258, 3
    %v1571 = vrot.slane %v259, 3
    %v1572 = vrot.slane %v260, 3
    %v1573 = vrot.slane %v261, 3
    %v1574 = vrot.slane %v262, 3
    %v1575 = vrot.slane %v263, 3
    %v1576 = vrot.slane %v264, 3
    %v1577 = vrot.slane %v265, 3
    %v1578 = vadd.s32 %v1514, %v1562
    %v1579 = vadd.s32 %v1515, %v1563
    %v1580 = vadd.s32 %v1516, %v1564
    %v1581 = vadd.s32 %v1517, %v1565
    %v1582 = vadd.s32 %v1518, %v1566
    %v1583 = vadd.s32 %v1519, %v1567
    %v1584 = vadd.s32 %v1520, %v1568
    %v1585 = vadd.s32 %v1521, %v1569
    %v1586 = vadd.s32 %v1522, %v1570
    %v1587 = vadd.s32 %v1523, %v1571
    %v1588 = vadd.s32 %v1524, %v1572
    %v1589 = vadd.s32 %v1525, %v1573
    %v1590 = vadd.s32 %v1526, %v1574
    %v1591 = vadd.s32 %v1527, %v1575
    %v1592 = vadd.s32 %v1528, %v1576
    %v1593 = vadd.s32 %v1529, %v1577
    %v1594 = vrot.slane %v330, 3
    %v1595 = vrot.slane %v331, 3
    %v1596 = vrot.slane %v332, 3
    %v1597 = vrot.slane %v333, 3
    %v1598 = vrot.slane %v334, 3
    %v1599 = vrot.slane %v335, 3
    %v1600 = vrot.slane %v336, 3
    %v1601 = vrot.slane %v337, 3
    %v1602 = vrot.slane %v338, 3
    %v1603 = vrot.slane %v339, 3
    %v1604 = vrot.slane %v340, 3
    %v1605 = vrot.slane %v341, 3
    %v1606 = vrot.slane %v342, 3
    %v1607 = vrot.slane %v343, 3
    %v1608 = vrot.slane %v344, 3
    %v1609 = vrot.slane %v345, 3
    %v1610 = vadd.s32 %v1354, %v1594
    %v1611 = vadd.s32 %v1355, %v1595
    %v1612 = vadd.s32 %v1356, %v1596
    %v1613 = vadd.s32 %v1357, %v1597
    %v1614 = vadd.s32 %v1358, %v1598
    %v1615 = vadd.s32 %v1359, %v1599
    %v1616 = vadd.s32 %v1360, %v1600
    %v1617 = vadd.s32 %v1361, %v1601
    %v1618 = vadd.s32 %v1362, %v1602
    %v1619 = vadd.s32 %v1363, %v1603
    %v1620 = vadd.s32 %v1364, %v1604
    %v1621 = vadd.s32 %v1365, %v1605
    %v1622 = vadd.s32 %v1366, %v1606
    %v1623 = vadd.s32 %v1367, %v1607
    %v1624 = vadd.s32 %v1368, %v1608
    %v1625 = vadd.s32 %v1369, %v1609
    %v1626 = vrot.slane %v346, 3
    %v1627 = vrot.slane %v347, 3
    %v1628 = vrot.slane %v348, 3
    %v1629 = vrot.slane %v349, 3
    %v1630 = vrot.slane %v350, 3
    %v1631 = vrot.slane %v351, 3
    %v1632 = vrot.slane %v352, 3
    %v1633 = vrot.slane %v353, 3
    %v1634 = vrot.slane %v354, 3
    %v1635 = vrot.slane %v355, 3
    %v1636 = vrot.slane %v356, 3
    %v1637 = vrot.slane %v357, 3
    %v1638 = vrot.slane %v358, 3
    %v1639 = vrot.slane %v359, 3
    %v1640 = vrot.slane %v360, 3
    %v1641 = vrot.slane %v361, 3
    %v1642 = vadd.s32 %v1578, %v1626
    %v1643 = vadd.s32 %v1579, %v1627
    %v1644 = vadd.s32 %v1580, %v1628
    %v1645 = vadd.s32 %v1581, %v1629
    %v1646 = vadd.s32 %v1582, %v1630
    %v1647 = vadd.s32 %v1583, %v1631
    %v1648 = vadd.s32 %v1584, %v1632
    %v1649 = vadd.s32 %v1585, %v1633
    %v1650 = vadd.s32 %v1586, %v1634
    %v1651 = vadd.s32 %v1587, %v1635
    %v1652 = vadd.s32 %v1588, %v1636
    %v1653 = vadd.s32 %v1589, %v1637
    %v1654 = vadd.s32 %v1590, %v1638
    %v1655 = vadd.s32 %v1591, %v1639
    %v1656 = vadd.s32 %v1592, %v1640
    %v1657 = vadd.s32 %v1593, %v1641
    %v1658 = vrot.slane %v426, 3
    %v1659 = vrot.slane %v427, 3
    %v1660 = vrot.slane %v428, 3
    %v1661 = vrot.slane %v429, 3
    %v1662 = vrot.slane %v430, 3
    %v1663 = vrot.slane %v431, 3
    %v1664 = vrot.slane %v432, 3
    %v1665 = vrot.slane %v433, 3
    %v1666 = vrot.slane %v434, 3
    %v1667 = vrot.slane %v435, 3
    %v1668 = vrot.slane %v436, 3
    %v1669 = vrot.slane %v437, 3
    %v1670 = vrot.slane %v438, 3
    %v1671 = vrot.slane %v439, 3
    %v1672 = vrot.slane %v440, 3
    %v1673 = vrot.slane %v441, 3
    %v1674 = vadd.s32 %v1418, %v1658
    %v1675 = vadd.s32 %v1419, %v1659
    %v1676 = vadd.s32 %v1420, %v1660
    %v1677 = vadd.s32 %v1421, %v1661
    %v1678 = vadd.s32 %v1422, %v1662
    %v1679 = vadd.s32 %v1423, %v1663
    %v1680 = vadd.s32 %v1424, %v1664
    %v1681 = vadd.s32 %v1425, %v1665
    %v1682 = vadd.s32 %v1426, %v1666
    %v1683 = vadd.s32 %v1427, %v1667
    %v1684 = vadd.s32 %v1428, %v1668
    %v1685 = vadd.s32 %v1429, %v1669
    %v1686 = vadd.s32 %v1430, %v1670
    %v1687 = vadd.s32 %v1431, %v1671
    %v1688 = vadd.s32 %v1432, %v1672
    %v1689 = vadd.s32 %v1433, %v1673
    %v1690 = vrot.slane %v442, 3
    %v1691 = vrot.slane %v443, 3
    %v1692 = vrot.slane %v444, 3
    %v1693 = vrot.slane %v445, 3
    %v1694 = vrot.slane %v446, 3
    %v1695 = vrot.slane %v447, 3
    %v1696 = vrot.slane %v448, 3
    %v1697 = vrot.slane %v449, 3
    %v1698 = vrot.slane %v450, 3
    %v1699 = vrot.slane %v451, 3
    %v1700 = vrot.slane %v452, 3
    %v1701 = vrot.slane %v453, 3
    %v1702 = vrot.slane %v454, 3
    %v1703 = vrot.slane %v455, 3
    %v1704 = vrot.slane %v456, 3
    %v1705 = vrot.slane %v457, 3
    %v1706 = vadd.s32 %v1642, %v1690
    %v1707 = vadd.s32 %v1643, %v1691
    %v1708 = vadd.s32 %v1644, %v1692
    %v1709 = vadd.s32 %v1645, %v1693
    %v1710 = vadd.s32 %v1646, %v1694
    %v1711 = vadd.s32 %v1647, %v1695
    %v1712 = vadd.s32 %v1648, %v1696
    %v1713 = vadd.s32 %v1649, %v1697
    %v1714 = vadd.s32 %v1650, %v1698
    %v1715 = vadd.s32 %v1651, %v1699
    %v1716 = vadd.s32 %v1652, %v1700
    %v1717 = vadd.s32 %v1653, %v1701
    %v1718 = vadd.s32 %v1654, %v1702
    %v1719 = vadd.s32 %v1655, %v1703
    %v1720 = vadd.s32 %v1656, %v1704
    %v1721 = vadd.s32 %v1657, %v1705
    %v1722 = vrot.slane %v154, 4
    %v1723 = vrot.slane %v155, 4
    %v1724 = vrot.slane %v156, 4
    %v1725 = vrot.slane %v157, 4
    %v1726 = vrot.slane %v158, 4
    %v1727 = vrot.slane %v159, 4
    %v1728 = vrot.slane %v160, 4
    %v1729 = vrot.slane %v161, 4
    %v1730 = vrot.slane %v162, 4
    %v1731 = vrot.slane %v163, 4
    %v1732 = vrot.slane %v164, 4
    %v1733 = vrot.slane %v165, 4
    %v1734 = vrot.slane %v166, 4
    %v1735 = vrot.slane %v167, 4
    %v1736 = vrot.slane %v168, 4
    %v1737 = vrot.slane %v169, 4
    %v1738 = vadd.s32 %v1546, %v1722
    %v1739 = vadd.s32 %v1547, %v1723
    %v1740 = vadd.s32 %v1548, %v1724
    %v1741 = vadd.s32 %v1549, %v1725
    %v1742 = vadd.s32 %v1550, %v1726
    %v1743 = vadd.s32 %v1551, %v1727
    %v1744 = vadd.s32 %v1552, %v1728
    %v1745 = vadd.s32 %v1553, %v1729
    %v1746 = vadd.s32 %v1554, %v1730
    %v1747 = vadd.s32 %v1555, %v1731
    %v1748 = vadd.s32 %v1556, %v1732
    %v1749 = vadd.s32 %v1557, %v1733
    %v1750 = vadd.s32 %v1558, %v1734
    %v1751 = vadd.s32 %v1559, %v1735
    %v1752 = vadd.s32 %v1560, %v1736
    %v1753 = vadd.s32 %v1561, %v1737
    %v1754 = vrot.slane %v170, 4
    %v1755 = vrot.slane %v171, 4
    %v1756 = vrot.slane %v172, 4
    %v1757 = vrot.slane %v173, 4
    %v1758 = vrot.slane %v174, 4
    %v1759 = vrot.slane %v175, 4
    %v1760 = vrot.slane %v176, 4
    %v1761 = vrot.slane %v177, 4
    %v1762 = vrot.slane %v178, 4
    %v1763 = vrot.slane %v179, 4
    %v1764 = vrot.slane %v180, 4
    %v1765 = vrot.slane %v181, 4
    %v1766 = vrot.slane %v182, 4
    %v1767 = vrot.slane %v183, 4
    %v1768 = vrot.slane %v184, 4
    %v1769 = vrot.slane %v185, 4
    %v1770 = vadd.s32 %v1482, %v1754
    %v1771 = vadd.s32 %v1483, %v1755
    %v1772 = vadd.s32 %v1484, %v1756
    %v1773 = vadd.s32 %v1485, %v1757
    %v1774 = vadd.s32 %v1486, %v1758
    %v1775 = vadd.s32 %v1487, %v1759
    %v1776 = vadd.s32 %v1488, %v1760
    %v1777 = vadd.s32 %v1489, %v1761
    %v1778 = vadd.s32 %v1490, %v1762
    %v1779 = vadd.s32 %v1491, %v1763
    %v1780 = vadd.s32 %v1492, %v1764
    %v1781 = vadd.s32 %v1493, %v1765
    %v1782 = vadd.s32 %v1494, %v1766
    %v1783 = vadd.s32 %v1495, %v1767
    %v1784 = vadd.s32 %v1496, %v1768
    %v1785 = vadd.s32 %v1497, %v1769
    %v1786 = vrot.slane %v234, 4
    %v1787 = vrot.slane %v235, 4
    %v1788 = vrot.slane %v236, 4
    %v1789 = vrot.slane %v237, 4
    %v1790 = vrot.slane %v238, 4
    %v1791 = vrot.slane %v239, 4
    %v1792 = vrot.slane %v240, 4
    %v1793 = vrot.slane %v241, 4
    %v1794 = vrot.slane %v242, 4
    %v1795 = vrot.slane %v243, 4
    %v1796 = vrot.slane %v244, 4
    %v1797 = vrot.slane %v245, 4
    %v1798 = vrot.slane %v246, 4
    %v1799 = vrot.slane %v247, 4
    %v1800 = vrot.slane %v248, 4
    %v1801 = vrot.slane %v249, 4
    %v1802 = vadd.s32 %v1610, %v1786
    %v1803 = vadd.s32 %v1611, %v1787
    %v1804 = vadd.s32 %v1612, %v1788
    %v1805 = vadd.s32 %v1613, %v1789
    %v1806 = vadd.s32 %v1614, %v1790
    %v1807 = vadd.s32 %v1615, %v1791
    %v1808 = vadd.s32 %v1616, %v1792
    %v1809 = vadd.s32 %v1617, %v1793
    %v1810 = vadd.s32 %v1618, %v1794
    %v1811 = vadd.s32 %v1619, %v1795
    %v1812 = vadd.s32 %v1620, %v1796
    %v1813 = vadd.s32 %v1621, %v1797
    %v1814 = vadd.s32 %v1622, %v1798
    %v1815 = vadd.s32 %v1623, %v1799
    %v1816 = vadd.s32 %v1624, %v1800
    %v1817 = vadd.s32 %v1625, %v1801
    %v1818 = vrot.slane %v250, 4
    %v1819 = vrot.slane %v251, 4
    %v1820 = vrot.slane %v252, 4
    %v1821 = vrot.slane %v253, 4
    %v1822 = vrot.slane %v254, 4
    %v1823 = vrot.slane %v255, 4
    %v1824 = vrot.slane %v256, 4
    %v1825 = vrot.slane %v257, 4
    %v1826 = vrot.slane %v258, 4
    %v1827 = vrot.slane %v259, 4
    %v1828 = vrot.slane %v260, 4
    %v1829 = vrot.slane %v261, 4
    %v1830 = vrot.slane %v262, 4
    %v1831 = vrot.slane %v263, 4
    %v1832 = vrot.slane %v264, 4
    %v1833 = vrot.slane %v265, 4
    %v1834 = vadd.s32 %v1770, %v1818
    %v1835 = vadd.s32 %v1771, %v1819
    %v1836 = vadd.s32 %v1772, %v1820
    %v1837 = vadd.s32 %v1773, %v1821
    %v1838 = vadd.s32 %v1774, %v1822
    %v1839 = vadd.s32 %v1775, %v1823
    %v1840 = vadd.s32 %v1776, %v1824
    %v1841 = vadd.s32 %v1777, %v1825
    %v1842 = vadd.s32 %v1778, %v1826
    %v1843 = vadd.s32 %v1779, %v1827
    %v1844 = vadd.s32 %v1780, %v1828
    %v1845 = vadd.s32 %v1781, %v1829
    %v1846 = vadd.s32 %v1782, %v1830
    %v1847 = vadd.s32 %v1783, %v1831
    %v1848 = vadd.s32 %v1784, %v1832
    %v1849 = vadd.s32 %v1785, %v1833
    %v1850 = vrot.slane %v330, 4
    %v1851 = vrot.slane %v331, 4
    %v1852 = vrot.slane %v332, 4
    %v1853 = vrot.slane %v333, 4
    %v1854 = vrot.slane %v334, 4
    %v1855 = vrot.slane %v335, 4
    %v1856 = vrot.slane %v336, 4
    %v1857 = vrot.slane %v337, 4
    %v1858 = vrot.slane %v338, 4
    %v1859 = vrot.slane %v339, 4
    %v1860 = vrot.slane %v340, 4
    %v1861 = vrot.slane %v341, 4
    %v1862 = vrot.slane %v342, 4
    %v1863 = vrot.slane %v343, 4
    %v1864 = vrot.slane %v344, 4
    %v1865 = vrot.slane %v345, 4
    %v1866 = vadd.s32 %v1674, %v1850
    %v1867 = vadd.s32 %v1675, %v1851
    %v1868 = vadd.s32 %v1676, %v1852
    %v1869 = vadd.s32 %v1677, %v1853
    %v1870 = vadd.s32 %v1678, %v1854
    %v1871 = vadd.s32 %v1679, %v1855
    %v1872 = vadd.s32 %v1680, %v1856
    %v1873 = vadd.s32 %v1681, %v1857
    %v1874 = vadd.s32 %v1682, %v1858
    %v1875 = vadd.s32 %v1683, %v1859
    %v1876 = vadd.s32 %v1684, %v1860
    %v1877 = vadd.s32 %v1685, %v1861
    %v1878 = vadd.s32 %v1686, %v1862
    %v1879 = vadd.s32 %v1687, %v1863
    %v1880 = vadd.s32 %v1688, %v1864
    %v1881 = vadd.s32 %v1689, %v1865
    %v1882 = vrot.slane %v346, 4
    %v1883 = vrot.slane %v347, 4
    %v1884 = vrot.slane %v348, 4
    %v1885 = vrot.slane %v349, 4
    %v1886 = vrot.slane %v350, 4
    %v1887 = vrot.slane %v351, 4
    %v1888 = vrot.slane %v352, 4
    %v1889 = vrot.slane %v353, 4
    %v1890 = vrot.slane %v354, 4
    %v1891 = vrot.slane %v355, 4
    %v1892 = vrot.slane %v356, 4
    %v1893 = vrot.slane %v357, 4
    %v1894 = vrot.slane %v358, 4
    %v1895 = vrot.slane %v359, 4
    %v1896 = vrot.slane %v360, 4
    %v1897 = vrot.slane %v361, 4
    %v1898 = vadd.s32 %v1834, %v1882
    %v1899 = vadd.s32 %v1835, %v1883
    %v1900 = vadd.s32 %v1836, %v1884
    %v1901 = vadd.s32 %v1837, %v1885
    %v1902 = vadd.s32 %v1838, %v1886
    %v1903 = vadd.s32 %v1839, %v1887
    %v1904 = vadd.s32 %v1840, %v1888
    %v1905 = vadd.s32 %v1841, %v1889
    %v1906 = vadd.s32 %v1842, %v1890
    %v1907 = vadd.s32 %v1843, %v1891
    %v1908 = vadd.s32 %v1844, %v1892
    %v1909 = vadd.s32 %v1845, %v1893
    %v1910 = vadd.s32 %v1846, %v1894
    %v1911 = vadd.s32 %v1847, %v1895
    %v1912 = vadd.s32 %v1848, %v1896
    %v1913 = vadd.s32 %v1849, %v1897
    %v1914 = vrot.slane %v154, 5
    %v1915 = vrot.slane %v155, 5
    %v1916 = vrot.slane %v156, 5
    %v1917 = vrot.slane %v157, 5
    %v1918 = vrot.slane %v158, 5
    %v1919 = vrot.slane %v159, 5
    %v1920 = vrot.slane %v160, 5
    %v1921 = vrot.slane %v161, 5
    %v1922 = vrot.slane %v162, 5
    %v1923 = vrot.slane %v163, 5
    %v1924 = vrot.slane %v164, 5
    %v1925 = vrot.slane %v165, 5
    %v1926 = vrot.slane %v166, 5
    %v1927 = vrot.slane %v167, 5
    %v1928 = vrot.slane %v168, 5
    %v1929 = vrot.slane %v169, 5
    %v1930 = vadd.s32 %v1802, %v1914
    %v1931 = vadd.s32 %v1803, %v1915
    %v1932 = vadd.s32 %v1804, %v1916
    %v1933 = vadd.s32 %v1805, %v1917
    %v1934 = vadd.s32 %v1806, %v1918
    %v1935 = vadd.s32 %v1807, %v1919
    %v1936 = vadd.s32 %v1808, %v1920
    %v1937 = vadd.s32 %v1809, %v1921
    %v1938 = vadd.s32 %v1810, %v1922
    %v1939 = vadd.s32 %v1811, %v1923
    %v1940 = vadd.s32 %v1812, %v1924
    %v1941 = vadd.s32 %v1813, %v1925
    %v1942 = vadd.s32 %v1814, %v1926
    %v1943 = vadd.s32 %v1815, %v1927
    %v1944 = vadd.s32 %v1816, %v1928
    %v1945 = vadd.s32 %v1817, %v1929
    %v1946 = vrot.slane %v170, 5
    %v1947 = vrot.slane %v171, 5
    %v1948 = vrot.slane %v172, 5
    %v1949 = vrot.slane %v173, 5
    %v1950 = vrot.slane %v174, 5
    %v1951 = vrot.slane %v175, 5
    %v1952 = vrot.slane %v176, 5
    %v1953 = vrot.slane %v177, 5
    %v1954 = vrot.slane %v178, 5
    %v1955 = vrot.slane %v179, 5
    %v1956 = vrot.slane %v180, 5
    %v1957 = vrot.slane %v181, 5
    %v1958 = vrot.slane %v182, 5
    %v1959 = vrot.slane %v183, 5
    %v1960 = vrot.slane %v184, 5
    %v1961 = vrot.slane %v185, 5
    %v1962 = vadd.s32 %v1738, %v1946
    %v1963 = vadd.s32 %v1739, %v1947
    %v1964 = vadd.s32 %v1740, %v1948
    %v1965 = vadd.s32 %v1741, %v1949
    %v1966 = vadd.s32 %v1742, %v1950
    %v1967 = vadd.s32 %v1743, %v1951
    %v1968 = vadd.s32 %v1744, %v1952
    %v1969 = vadd.s32 %v1745, %v1953
    %v1970 = vadd.s32 %v1746, %v1954
    %v1971 = vadd.s32 %v1747, %v1955
    %v1972 = vadd.s32 %v1748, %v1956
    %v1973 = vadd.s32 %v1749, %v1957
    %v1974 = vadd.s32 %v1750, %v1958
    %v1975 = vadd.s32 %v1751, %v1959
    %v1976 = vadd.s32 %v1752, %v1960
    %v1977 = vadd.s32 %v1753, %v1961
    %v1978 = vrot.slane %v234, 5
    %v1979 = vrot.slane %v235, 5
    %v1980 = vrot.slane %v236, 5
    %v1981 = vrot.slane %v237, 5
    %v1982 = vrot.slane %v238, 5
    %v1983 = vrot.slane %v239, 5
    %v1984 = vrot.slane %v240, 5
    %v1985 = vrot.slane %v241, 5
    %v1986 = vrot.slane %v242, 5
    %v1987 = vrot.slane %v243, 5
    %v1988 = vrot.slane %v244, 5
    %v1989 = vrot.slane %v245, 5
    %v1990 = vrot.slane %v246, 5
    %v1991 = vrot.slane %v247, 5
    %v1992 = vrot.slane %v248, 5
    %v1993 = vrot.slane %v249, 5
    %v1994 = vadd.s32 %v1866, %v1978
    %v1995 = vadd.s32 %v1867, %v1979
    %v1996 = vadd.s32 %v1868, %v1980
    %v1997 = vadd.s32 %v1869, %v1981
    %v1998 = vadd.s32 %v1870, %v1982
    %v1999 = vadd.s32 %v1871, %v1983
    %v2000 = vadd.s32 %v1872, %v1984
    %v2001 = vadd.s32 %v1873, %v1985
    %v2002 = vadd.s32 %v1874, %v1986
    %v2003 = vadd.s32 %v1875, %v1987
    %v2004 = vadd.s32 %v1876, %v1988
    %v2005 = vadd.s32 %v1877, %v1989
    %v2006 = vadd.s32 %v1878, %v1990
    %v2007 = vadd.s32 %v1879, %v1991
    %v2008 = vadd.s32 %v1880, %v1992
    %v2009 = vadd.s32 %v1881, %v1993
    %v2010 = vrot.slane %v250, 5
    %v2011 = vrot.slane %v251, 5
    %v2012 = vrot.slane %v252, 5
    %v2013 = vrot.slane %v253, 5
    %v2014 = vrot.slane %v254, 5
    %v2015 = vrot.slane %v255, 5
    %v2016 = vrot.slane %v256, 5
    %v2017 = vrot.slane %v257, 5
    %v2018 = vrot.slane %v258, 5
    %v2019 = vrot.slane %v259, 5
    %v2020 = vrot.slane %v260, 5
    %v2021 = vrot.slane %v261, 5
    %v2022 = vrot.slane %v262, 5
    %v2023 = vrot.slane %v263, 5
    %v2024 = vrot.slane %v264, 5
    %v2025 = vrot.slane %v265, 5
    %v2026 = vadd.s32 %v1962, %v2010
    %v2027 = vadd.s32 %v1963, %v2011
    %v2028 = vadd.s32 %v1964, %v2012
    %v2029 = vadd.s32 %v1965, %v2013
    %v2030 = vadd.s32 %v1966, %v2014
    %v2031 = vadd.s32 %v1967, %v2015
    %v2032 = vadd.s32 %v1968, %v2016
    %v2033 = vadd.s32 %v1969, %v2017
    %v2034 = vadd.s32 %v1970, %v2018
    %v2035 = vadd.s32 %v1971, %v2019
    %v2036 = vadd.s32 %v1972, %v2020
    %v2037 = vadd.s32 %v1973, %v2021
    %v2038 = vadd.s32 %v1974, %v2022
    %v2039 = vadd.s32 %v1975, %v2023
    %v2040 = vadd.s32 %v1976, %v2024
    %v2041 = vadd.s32 %v1977, %v2025
    %v2042 = vrot.slane %v154, 6
    %v2043 = vrot.slane %v155, 6
    %v2044 = vrot.slane %v156, 6
    %v2045 = vrot.slane %v157, 6
    %v2046 = vrot.slane %v158, 6
    %v2047 = vrot.slane %v159, 6
    %v2048 = vrot.slane %v160, 6
    %v2049 = vrot.slane %v161, 6
    %v2050 = vrot.slane %v162, 6
    %v2051 = vrot.slane %v163, 6
    %v2052 = vrot.slane %v164, 6
    %v2053 = vrot.slane %v165, 6
    %v2054 = vrot.slane %v166, 6
    %v2055 = vrot.slane %v167, 6
    %v2056 = vrot.slane %v168, 6
    %v2057 = vrot.slane %v169, 6
    %v2058 = vadd.s32 %v1994, %v2042
    %v2059 = vadd.s32 %v1995, %v2043
    %v2060 = vadd.s32 %v1996, %v2044
    %v2061 = vadd.s32 %v1997, %v2045
    %v2062 = vadd.s32 %v1998, %v2046
    %v2063 = vadd.s32 %v1999, %v2047
    %v2064 = vadd.s32 %v2000, %v2048
    %v2065 = vadd.s32 %v2001, %v2049
    %v2066 = vadd.s32 %v2002, %v2050
    %v2067 = vadd.s32 %v2003, %v2051
    %v2068 = vadd.s32 %v2004, %v2052
    %v2069 = vadd.s32 %v2005, %v2053
    %v2070 = vadd.s32 %v2006, %v2054
    %v2071 = vadd.s32 %v2007, %v2055
    %v2072 = vadd.s32 %v2008, %v2056
    %v2073 = vadd.s32 %v2009, %v2057
    %v2074 = vrot.slane %v170, 6
    %v2075 = vrot.slane %v171, 6
    %v2076 = vrot.slane %v172, 6
    %v2077 = vrot.slane %v173, 6
    %v2078 = vrot.slane %v174, 6
    %v2079 = vrot.slane %v175, 6
    %v2080 = vrot.slane %v176, 6
    %v2081 = vrot.slane %v177, 6
    %v2082 = vrot.slane %v178, 6
    %v2083 = vrot.slane %v179, 6
    %v2084 = vrot.slane %v180, 6
    %v2085 = vrot.slane %v181, 6
    %v2086 = vrot.slane %v182, 6
    %v2087 = vrot.slane %v183, 6
    %v2088 = vrot.slane %v184, 6
    %v2089 = vrot.slane %v185, 6
    %v2090 = vadd.s32 %v1930, %v2074
    %v2091 = vadd.s32 %v1931, %v2075
    %v2092 = vadd.s32 %v1932, %v2076
    %v2093 = vadd.s32 %v1933, %v2077
    %v2094 = vadd.s32 %v1934, %v2078
    %v2095 = vadd.s32 %v1935, %v2079
    %v2096 = vadd.s32 %v1936, %v2080
    %v2097 = vadd.s32 %v1937, %v2081
    %v2098 = vadd.s32 %v1938, %v2082
    %v2099 = vadd.s32 %v1939, %v2083
    %v2100 = vadd.s32 %v1940, %v2084
    %v2101 = vadd.s32 %v1941, %v2085
    %v2102 = vadd.s32 %v1942, %v2086
    %v2103 = vadd.s32 %v1943, %v2087
    %v2104 = vadd.s32 %v1944, %v2088
    %v2105 = vadd.s32 %v1945, %v2089
    %v2106 = vrot.slane %v1130, 7
    %v2107 = vrot.slane %v1131, 7
    %v2108 = vrot.slane %v1132, 7
    %v2109 = vrot.slane %v1133, 7
    %v2110 = vrot.slane %v1134, 7
    %v2111 = vrot.slane %v1135, 7
    %v2112 = vrot.slane %v1136, 7
    %v2113 = vrot.slane %v1137, 7
    %v2114 = vrot.slane %v1138, 7
    %v2115 = vrot.slane %v1139, 7
    %v2116 = vrot.slane %v1140, 7
    %v2117 = vrot.slane %v1141, 7
    %v2118 = vrot.slane %v1142, 7
    %v2119 = vrot.slane %v1143, 7
    %v2120 = vrot.slane %v1144, 7
    %v2121 = vrot.slane %v1145, 7
    %v2122 = vrot.slane %v1450, 6
    %v2123 = vrot.slane %v1451, 6
    %v2124 = vrot.slane %v1452, 6
    %v2125 = vrot.slane %v1453, 6
    %v2126 = vrot.slane %v1454, 6
    %v2127 = vrot.slane %v1455, 6
    %v2128 = vrot.slane %v1456, 6
    %v2129 = vrot.slane %v1457, 6
    %v2130 = vrot.slane %v1458, 6
    %v2131 = vrot.slane %v1459, 6
    %v2132 = vrot.slane %v1460, 6
    %v2133 = vrot.slane %v1461, 6
    %v2134 = vrot.slane %v1462, 6
    %v2135 = vrot.slane %v1463, 6
    %v2136 = vrot.slane %v1464, 6
    %v2137 = vrot.slane %v1465, 6
    %v2138 = vrot.slane %v1706, 5
    %v2139 = vrot.slane %v1707, 5
    %v2140 = vrot.slane %v1708, 5
    %v2141 = vrot.slane %v1709, 5
    %v2142 = vrot.slane %v1710, 5
    %v2143 = vrot.slane %v1711, 5
    %v2144 = vrot.slane %v1712, 5
    %v2145 = vrot.slane %v1713, 5
    %v2146 = vrot.slane %v1714, 5
    %v2147 = vrot.slane %v1715, 5
    %v2148 = vrot.slane %v1716, 5
    %v2149 = vrot.slane %v1717, 5
    %v2150 = vrot.slane %v1718, 5
    %v2151 = vrot.slane %v1719, 5
    %v2152 = vrot.slane %v1720, 5
    %v2153 = vrot.slane %v1721, 5
    %v2154 = vrot.slane %v1898, 4
    %v2155 = vrot.slane %v1899, 4
    %v2156 = vrot.slane %v1900, 4
    %v2157 = vrot.slane %v1901, 4
    %v2158 = vrot.slane %v1902, 4
    %v2159 = vrot.slane %v1903, 4
    %v2160 = vrot.slane %v1904, 4
    %v2161 = vrot.slane %v1905, 4
    %v2162 = vrot.slane %v1906, 4
    %v2163 = vrot.slane %v1907, 4
    %v2164 = vrot.slane %v1908, 4
    %v2165 = vrot.slane %v1909, 4
    %v2166 = vrot.slane %v1910, 4
    %v2167 = vrot.slane %v1911, 4
    %v2168 = vrot.slane %v1912, 4
    %v2169 = vrot.slane %v1913, 4
    %v2170 = vrot.slane %v2026, 3
    %v2171 = vrot.slane %v2027, 3
    %v2172 = vrot.slane %v2028, 3
    %v2173 = vrot.slane %v2029, 3
    %v2174 = vrot.slane %v2030, 3
    %v2175 = vrot.slane %v2031, 3
    %v2176 = vrot.slane %v2032, 3
    %v2177 = vrot.slane %v2033, 3
    %v2178 = vrot.slane %v2034, 3
    %v2179 = vrot.slane %v2035, 3
    %v2180 = vrot.slane %v2036, 3
    %v2181 = vrot.slane %v2037, 3
    %v2182 = vrot.slane %v2038, 3
    %v2183 = vrot.slane %v2039, 3
    %v2184 = vrot.slane %v2040, 3
    %v2185 = vrot.slane %v2041, 3
    %v2186 = vrot.slane %v2090, 2
    %v2187 = vrot.slane %v2091, 2
    %v2188 = vrot.slane %v2092, 2
    %v2189 = vrot.slane %v2093, 2
    %v2190 = vrot.slane %v2094, 2
    %v2191 = vrot.slane %v2095, 2
    %v2192 = vrot.slane %v2096, 2
    %v2193 = vrot.slane %v2097, 2
    %v2194 = vrot.slane %v2098, 2
    %v2195 = vrot.slane %v2099, 2
    %v2196 = vrot.slane %v2100, 2
    %v2197 = vrot.slane %v2101, 2
    %v2198 = vrot.slane %v2102, 2
    %v2199 = vrot.slane %v2103, 2
    %v2200 = vrot.slane %v2104, 2
    %v2201 = vrot.slane %v2105, 2
    %v2202 = vrot.slane %v2058, 1
    %v2203 = vrot.slane %v2059, 1
    %v2204 = vrot.slane %v2060, 1
    %v2205 = vrot.slane %v2061, 1
    %v2206 = vrot.slane %v2062, 1
    %v2207 = vrot.slane %v2063, 1
    %v2208 = vrot.slane %v2064, 1
    %v2209 = vrot.slane %v2065, 1
    %v2210 = vrot.slane %v2066, 1
    %v2211 = vrot.slane %v2067, 1
    %v2212 = vrot.slane %v2068, 1
    %v2213 = vrot.slane %v2069, 1
    %v2214 = vrot.slane %v2070, 1
    %v2215 = vrot.slane %v2071, 1
    %v2216 = vrot.slane %v2072, 1
    %v2217 = vrot.slane %v2073, 1
    %vm2218 = vcmask 1040384
    %v2219 = vsel %vm2218, %v746, %v2106
    %v2220 = vsel %vm2218, %v747, %v2107
    %v2221 = vsel %vm2218, %v748, %v2108
    %v2222 = vsel %vm2218, %v749, %v2109
    %v2223 = vsel %vm2218, %v750, %v2110
    %v2224 = vsel %vm2218, %v751, %v2111
    %v2225 = vsel %vm2218, %v752, %v2112
    %v2226 = vsel %vm2218, %v753, %v2113
    %v2227 = vsel %vm2218, %v754, %v2114
    %v2228 = vsel %vm2218, %v755, %v2115
    %v2229 = vsel %vm2218, %v756, %v2116
    %v2230 = vsel %vm2218, %v757, %v2117
    %v2231 = vsel %vm2218, %v758, %v2118
    %v2232 = vsel %vm2218, %v759, %v2119
    %v2233 = vsel %vm2218, %v760, %v2120
    %v2234 = vsel %vm2218, %v761, %v2121
    %vm2235 = vcmask 1041408
    %v2236 = vsel %vm2235, %v2219, %v2122
    %v2237 = vsel %vm2235, %v2220, %v2123
    %v2238 = vsel %vm2235, %v2221, %v2124
    %v2239 = vsel %vm2235, %v2222, %v2125
    %v2240 = vsel %vm2235, %v2223, %v2126
    %v2241 = vsel %vm2235, %v2224, %v2127
    %v2242 = vsel %vm2235, %v2225, %v2128
    %v2243 = vsel %vm2235, %v2226, %v2129
    %v2244 = vsel %vm2235, %v2227, %v2130
    %v2245 = vsel %vm2235, %v2228, %v2131
    %v2246 = vsel %vm2235, %v2229, %v2132
    %v2247 = vsel %vm2235, %v2230, %v2133
    %v2248 = vsel %vm2235, %v2231, %v2134
    %v2249 = vsel %vm2235, %v2232, %v2135
    %v2250 = vsel %vm2235, %v2233, %v2136
    %v2251 = vsel %vm2235, %v2234, %v2137
    %vm2252 = vcmask 1042432
    %v2253 = vsel %vm2252, %v2236, %v2138
    %v2254 = vsel %vm2252, %v2237, %v2139
    %v2255 = vsel %vm2252, %v2238, %v2140
    %v2256 = vsel %vm2252, %v2239, %v2141
    %v2257 = vsel %vm2252, %v2240, %v2142
    %v2258 = vsel %vm2252, %v2241, %v2143
    %v2259 = vsel %vm2252, %v2242, %v2144
    %v2260 = vsel %vm2252, %v2243, %v2145
    %v2261 = vsel %vm2252, %v2244, %v2146
    %v2262 = vsel %vm2252, %v2245, %v2147
    %v2263 = vsel %vm2252, %v2246, %v2148
    %v2264 = vsel %vm2252, %v2247, %v2149
    %v2265 = vsel %vm2252, %v2248, %v2150
    %v2266 = vsel %vm2252, %v2249, %v2151
    %v2267 = vsel %vm2252, %v2250, %v2152
    %v2268 = vsel %vm2252, %v2251, %v2153
    %vm2269 = vcmask 1043456
    %v2270 = vsel %vm2269, %v2253, %v2154
    %v2271 = vsel %vm2269, %v2254, %v2155
    %v2272 = vsel %vm2269, %v2255, %v2156
    %v2273 = vsel %vm2269, %v2256, %v2157
    %v2274 = vsel %vm2269, %v2257, %v2158
    %v2275 = vsel %vm2269, %v2258, %v2159
    %v2276 = vsel %vm2269, %v2259, %v2160
    %v2277 = vsel %vm2269, %v2260, %v2161
    %v2278 = vsel %vm2269, %v2261, %v2162
    %v2279 = vsel %vm2269, %v2262, %v2163
    %v2280 = vsel %vm2269, %v2263, %v2164
    %v2281 = vsel %vm2269, %v2264, %v2165
    %v2282 = vsel %vm2269, %v2265, %v2166
    %v2283 = vsel %vm2269, %v2266, %v2167
    %v2284 = vsel %vm2269, %v2267, %v2168
    %v2285 = vsel %vm2269, %v2268, %v2169
    %vm2286 = vcmask 1044480
    %v2287 = vsel %vm2286, %v2270, %v2170
    %v2288 = vsel %vm2286, %v2271, %v2171
    %v2289 = vsel %vm2286, %v2272, %v2172
    %v2290 = vsel %vm2286, %v2273, %v2173
    %v2291 = vsel %vm2286, %v2274, %v2174
    %v2292 = vsel %vm2286, %v2275, %v2175
    %v2293 = vsel %vm2286, %v2276, %v2176
    %v2294 = vsel %vm2286, %v2277, %v2177
    %v2295 = vsel %vm2286, %v2278, %v2178
    %v2296 = vsel %vm2286, %v2279, %v2179
    %v2297 = vsel %vm2286, %v2280, %v2180
    %v2298 = vsel %vm2286, %v2281, %v2181
    %v2299 = vsel %vm2286, %v2282, %v2182
    %v2300 = vsel %vm2286, %v2283, %v2183
    %v2301 = vsel %vm2286, %v2284, %v2184
    %v2302 = vsel %vm2286, %v2285, %v2185
    %vm2303 = vcmask 1045504
    %v2304 = vsel %vm2303, %v2287, %v2186
    %v2305 = vsel %vm2303, %v2288, %v2187
    %v2306 = vsel %vm2303, %v2289, %v2188
    %v2307 = vsel %vm2303, %v2290, %v2189
    %v2308 = vsel %vm2303, %v2291, %v2190
    %v2309 = vsel %vm2303, %v2292, %v2191
    %v2310 = vsel %vm2303, %v2293, %v2192
    %v2311 = vsel %vm2303, %v2294, %v2193
    %v2312 = vsel %vm2303, %v2295, %v2194
    %v2313 = vsel %vm2303, %v2296, %v2195
    %v2314 = vsel %vm2303, %v2297, %v2196
    %v2315 = vsel %vm2303, %v2298, %v2197
    %v2316 = vsel %vm2303, %v2299, %v2198
    %v2317 = vsel %vm2303, %v2300, %v2199
    %v2318 = vsel %vm2303, %v2301, %v2200
    %v2319 = vsel %vm2303, %v2302, %v2201
    %vm2320 = vcmask 1046528
    %v2321 = vsel %vm2320, %v2304, %v2202
    %v2322 = vsel %vm2320, %v2305, %v2203
    %v2323 = vsel %vm2320, %v2306, %v2204
    %v2324 = vsel %vm2320, %v2307, %v2205
    %v2325 = vsel %vm2320, %v2308, %v2206
    %v2326 = vsel %vm2320, %v2309, %v2207
    %v2327 = vsel %vm2320, %v2310, %v2208
    %v2328 = vsel %vm2320, %v2311, %v2209
    %v2329 = vsel %vm2320, %v2312, %v2210
    %v2330 = vsel %vm2320, %v2313, %v2211
    %v2331 = vsel %vm2320, %v2314, %v2212
    %v2332 = vsel %vm2320, %v2315, %v2213
    %v2333 = vsel %vm2320, %v2316, %v2214
    %v2334 = vsel %vm2320, %v2317, %v2215
    %v2335 = vsel %vm2320, %v2318, %v2216
    %v2336 = vsel %vm2320, %v2319, %v2217
    %vm2337 = vcmp.lt.s32.totalorder %v2321, 3
    %vm2338 = vcmp.lt.s32.totalorder %v2322, 3
    %vm2339 = vcmp.lt.s32.totalorder %v2323, 3
    %vm2340 = vcmp.lt.s32.totalorder %v2324, 3
    %vm2341 = vcmp.lt.s32.totalorder %v2325, 3
    %vm2342 = vcmp.lt.s32.totalorder %v2326, 3
    %vm2343 = vcmp.lt.s32.totalorder %v2327, 3
    %vm2344 = vcmp.lt.s32.totalorder %v2328, 3
    %vm2345 = vcmp.lt.s32.totalorder %v2329, 3
    %vm2346 = vcmp.lt.s32.totalorder %v2330, 3
    %vm2347 = vcmp.lt.s32.totalorder %v2331, 3
    %vm2348 = vcmp.lt.s32.totalorder %v2332, 3
    %vm2349 = vcmp.lt.s32.totalorder %v2333, 3
    %vm2350 = vcmp.lt.s32.totalorder %v2334, 3
    %vm2351 = vcmp.lt.s32.totalorder %v2335, 3
    %vm2352 = vcmp.lt.s32.totalorder %v2336, 3
    %v2353 = vsel %vm2337, %v58, 0.0
    %v2354 = vsel %vm2338, %v59, 0.0
    %v2355 = vsel %vm2339, %v60, 0.0
    %v2356 = vsel %vm2340, %v61, 0.0
    %v2357 = vsel %vm2341, %v62, 0.0
    %v2358 = vsel %vm2342, %v63, 0.0
    %v2359 = vsel %vm2343, %v64, 0.0
    %v2360 = vsel %vm2344, %v65, 0.0
    %v2361 = vsel %vm2345, %v66, 0.0
    %v2362 = vsel %vm2346, %v67, 0.0
    %v2363 = vsel %vm2347, %v68, 0.0
    %v2364 = vsel %vm2348, %v69, 0.0
    %v2365 = vsel %vm2349, %v70, 0.0
    %v2366 = vsel %vm2350, %v71, 0.0
    %v2367 = vsel %vm2351, %v72, 0.0
    %v2368 = vsel %vm2352, %v73, 0.0
    %v2369 = vld [vmem:[#allocation2] sm:$0xff]
    %2370 = vmatprep.subr.mxu0 0.0
    %2371 = vmatpush1.msra.mxu0 %v2368
    %2372 = vmatprep.subr.mxu0 0.0
    %2373 = vmatpush1.msra.mxu0 %v2367
    %2374 = vmatprep.subr.mxu0 0.0
    %2375 = vmatpush1.msra.mxu0 %v2366
    %2376 = vmatprep.subr.mxu0 0.0
    %2377 = vmatpush1.msra.mxu0 %v2365
    %2378 = vmatprep.subr.mxu0 0.0
    %2379 = vmatpush1.msra.mxu0 %v2364
    %2380 = vmatprep.subr.mxu0 0.0
    %2381 = vmatpush1.msra.mxu0 %v2363
    %2382 = vmatprep.subr.mxu0 0.0
    %2383 = vmatpush1.msra.mxu0 %v2362
    %2384 = vmatprep.subr.mxu0 0.0
    %2385 = vmatpush1.msra.mxu0 %v2361
    %2386 = vmatprep.subr.mxu0 0.0
    %2387 = vmatpush1.msra.mxu0 %v2360
    %2388 = vmatprep.subr.mxu0 0.0
    %2389 = vmatpush1.msra.mxu0 %v2359
    %2390 = vmatprep.subr.mxu0 0.0
    %2391 = vmatpush1.msra.mxu0 %v2358
    %2392 = vmatprep.subr.mxu0 0.0
    %2393 = vmatpush1.msra.mxu0 %v2357
    %2394 = vmatprep.subr.mxu0 0.0
    %2395 = vmatpush1.msra.mxu0 %v2356
    %2396 = vmatprep.subr.mxu0 0.0
    %2397 = vmatpush1.msra.mxu0 %v2355
    %2398 = vmatprep.subr.mxu0 0.0
    %2399 = vmatpush1.msra.mxu0 %v2354
    %2400 = vmatprep.subr.mxu0 0.0
    %2401 = vmatpush1.msra.mxu0 %v2353
    %2402 = vmatprep.subr.mxu0 0.0
    %2403 = vmatpush2.msra.mxu0 0.0
    %2404 = vmatprep.subr.mxu0 0.0
    %2405 = vmatpush2.msra.mxu0 0.0
    %2406 = vmatprep.subr.mxu0 0.0
    %2407 = vmatpush2.msra.mxu0 0.0
    %2408 = vmatprep.subr.mxu0 0.0
    %2409 = vmatpush2.msra.mxu0 0.0
    %2410 = vmatprep.subr.mxu0 0.0
    %2411 = vmatpush2.msra.mxu0 0.0
    %2412 = vmatprep.subr.mxu0 0.0
    %2413 = vmatpush2.msra.mxu0 0.0
    %2414 = vmatprep.subr.mxu0 0.0
    %2415 = vmatpush2.msra.mxu0 0.0
    %2416 = vmatprep.subr.mxu0 0.0
    %2417 = vmatpush2.msra.mxu0 0.0
    %2418 = vmatprep.subr.mxu0 0.0
    %2419 = vmatpush2.msra.mxu0 0.0
    %2420 = vmatprep.subr.mxu0 0.0
    %2421 = vmatpush2.msra.mxu0 0.0
    %2422 = vmatprep.subr.mxu0 0.0
    %2423 = vmatpush2.msra.mxu0 0.0
    %2424 = vmatprep.subr.mxu0 0.0
    %2425 = vmatpush2.msra.mxu0 0.0
    %2426 = vmatprep.subr.mxu0 0.0
    %2427 = vmatpush2.msra.mxu0 0.0
    %2428 = vmatprep.subr.mxu0 0.0
    %2429 = vmatpush2.msra.mxu0 0.0
    %2430 = vmatprep.subr.mxu0 0.0
    %2431 = vmatpush2.msra.mxu0 0.0
    %2432 = vmatprep.subr.mxu0 0.0
    %2433 = vmatpush2.msra.mxu0 0.0
    %2434 = vmatprep.mubr.f32.mxu0 0.0
    %2435 = vmatmul.mubr.f32.gmra.mxu0 %v2369
    %v2436 = vpop.f32.mrf.mxu0
    %v2437 = vadd.f32 0.0, %v2436
    %v2438 = vpop.f32.mrf.mxu0
    %2439 = vdwg.mxu0
    %vm2440 = vcmask 261120
    %2441 = vst.msk [vmem:[#allocation7] sm:$0xff] %vm2440, %v2437
    // Predicated region
    $region18: #{tpu_custom_call.1} parent=1 // pred_check
      _
    $region19: #{tpu_custom_call.1} parent=1 // pred_check_branch
      %2443 = sbr.rel (0) target = $region21
    $region20: #{tpu_custom_call.1} parent=1 // pred_region
      %s2445 = ssub.s32 128, 128
      %2446 = vsyncadd [#allocation4], %s2445
      %s2448 = sshll.u32 [#allocation7], 4
      %s2449 = int_to_ptr.vmem [resolvable:$true] %s2448
      %2451 = dma.vmem_to_hbm [thread:$0]  %s2449, 128, %s2, [#allocation4]
    $region21: #{tpu_custom_call.1} parent=1 // pred_fallthru
      _
    // Predicated region
    $region22: #{tpu_custom_call.1} parent=1 // pred_check
      _
    $region23: #{tpu_custom_call.1} parent=1 // pred_check_branch
      %2453 = sbr.rel (0) target = $region25
    $region24: #{tpu_custom_call.1} parent=1 // pred_region
      %2454 = dma.done [#allocation4], 128
    $region25: #{tpu_custom_call.1} parent=1 // pred_fallthru
      _
    %2455 = vsyncpa [#allocation3], 1
    %2456 = vsyncpa [#allocation6], 1
    %2457 = vsyncpa [#allocation4], 1

</llo_original>
